<compile_context>
chip_gen: v7x
topology: tpu7x:2x2x1
jax: 0.10.0
libtpu: 0.0.40
codegen_flags: <defaults>
</compile_context>

<pallas_src>
import functools
import math

import jax
import jax.numpy as jnp
from jax.experimental import pallas as pl
from jax.experimental.pallas import tpu as pltpu

_NEG_BIG = -1e30              # finite "-inf": fully-masked flash tiles never NaN
_VMEM_LIMIT = 32 * 1024 * 1024


def _pick_tile(n, cap, mult):
    """Largest t <= cap with t % mult == 0 and n % t == 0, else n (full dim)."""
    if n <= cap:
        return n
    t = (cap // mult) * mult
    while t >= mult:
        if n % t == 0:
            return t
        t -= mult
    return n


# --------------------- Kernel A: RMSNorm + fused QKV + RoPE -------------------
def qkv_rope_kernel(x_ref, nw_ref, wqkv_ref, cos_ref, sin_ref,
                    q_ref, k_ref, v_ref, acc_ref, ssq_ref, *,
                    eps, dim, q_scale):
    k_step = pl.program_id(2)

    @pl.when(k_step == 0)
    def _():
        acc_ref[...] = jnp.zeros_like(acc_ref)
        ssq_ref[...] = jnp.zeros_like(ssq_ref)

    x = x_ref[...]                                            # (S_t, k_t) f32
    ssq_ref[...] += jnp.sum(x * x, axis=-1, keepdims=True)
    xw = (x * nw_ref[...]).astype(jnp.bfloat16)               # norm weight folded in
    acc_ref[...] += jnp.dot(xw, wqkv_ref[...],
                            preferred_element_type=jnp.float32)   # (S_t, 3D)

    @pl.when(k_step == pl.num_programs(2) - 1)
    def _():
        # rmsnorm(x) @ W == rsqrt(mean(x^2)+eps) * ((x * w_norm) @ W)
        inv = jax.lax.rsqrt(ssq_ref[...] * (1.0 / dim) + eps)     # (S_t, 1)
        hp = acc_ref[...] * inv                                   # (S_t, 3D)
        two_d = 2 * dim
        qk = hp[:, :two_d]
        # interleaved-pair RoPE: rot[2i] = -qk[2i+1], rot[2i+1] = qk[2i]
        lane = jax.lax.broadcasted_iota(jnp.int32, qk.shape, 1)
        rot = jnp.where((lane % 2) == 0,
                        -pltpu.roll(qk, two_d - 1, axis=1),
                        pltpu.roll(qk, 1, axis=1))
        qk = (qk * cos_ref[...].astype(jnp.float32)
              + rot * sin_ref[...].astype(jnp.float32))
        q_ref[...] = (qk[:, :dim] * q_scale).astype(q_ref.dtype)  # 1/sqrt(Hd) folded
        k_ref[...] = qk[:, dim:]
        v_ref[...] = hp[:, two_d:]


# --------------------- Kernel B1: flash attention (per head) ------------------
def flash_attn_kernel(q_ref, k_ref, v_ref, o_ref, m_ref, l_ref, acc_ref, *,
                      start_pos, s_tile, kv_tile):
    sq = pl.program_id(1)
    t = pl.program_id(3)

    @pl.when(t == 0)
    def _():
        m_ref[...] = jnp.full(m_ref.shape, _NEG_BIG, m_ref.dtype)
        l_ref[...] = jnp.zeros_like(l_ref)
        acc_ref[...] = jnp.zeros_like(acc_ref)

    q = q_ref[...].astype(jnp.bfloat16)                       # (S_t, Hd), pre-scaled
    k = k_ref[...].astype(jnp.bfloat16)                       # (T_t, Hd)
    s = jax.lax.dot_general(q, k, (((1,), (1,)), ((), ())),
                            preferred_element_type=jnp.float32)   # (S_t, T_t)

    # Causal mask generated in-kernel (no dense (S, T) mask DMA).  Key rows
    # past T read from the (zeroed) cache tail are masked by the same test.
    q_pos = (start_pos + sq * s_tile
             + jax.lax.broadcasted_iota(jnp.int32, s.shape, 0))
    k_pos = t * kv_tile + jax.lax.broadcasted_iota(jnp.int32, s.shape, 1)
    s = jnp.where(k_pos <= q_pos, s, _NEG_BIG)

    m_prev = m_ref[...]
    m_new = jnp.maximum(m_prev, jnp.max(s, axis=-1, keepdims=True))
    alpha = jnp.exp(m_prev - m_new)
    p = jnp.exp(s - m_new)
    l_ref[...] = alpha * l_ref[...] + jnp.sum(p, axis=-1, keepdims=True)
    acc_ref[...] = alpha * acc_ref[...] + jnp.dot(
        p.astype(jnp.bfloat16), v_ref[...].astype(jnp.bfloat16),
        preferred_element_type=jnp.float32)
    m_ref[...] = m_new

    @pl.when(t == pl.num_programs(3) - 1)
    def _():
        o_ref[...] = (acc_ref[...] * pl.reciprocal(l_ref[...], approx=True)
                      ).astype(o_ref.dtype)


# --------------------- Kernel B2: Wo + residual + FFN + residual --------------
def wo_ffn_kernel(x_ref, ctx_ref, wo_ref, nw_ref, w13_ref, w2_ref,
                  out_ref, hn_ref, *, eps, hf_tile):
    f = pl.program_id(1)

    @pl.when(f == 0)
    def _():
        # Deferred Wo projection (K = D, fills 256-deep MXU) + first residual.
        h = x_ref[...] + jnp.dot(ctx_ref[...], wo_ref[...],
                                 preferred_element_type=jnp.float32)    # (rt, D)
        out_ref[...] = h                     # residual carried in resident block
        ms = jnp.mean(h * h, axis=-1, keepdims=True)
        hn_ref[...] = (h * jax.lax.rsqrt(ms + eps) * nw_ref[...]
                       ).astype(jnp.bfloat16)

    hn = hn_ref[...]                                                    # (rt, D)
    gu = jnp.dot(hn, w13_ref[...], preferred_element_type=jnp.float32)  # (rt, 2hf)
    g = gu[:, :hf_tile]
    u = gu[:, hf_tile:]
    act = (g * jax.nn.sigmoid(g) * u).astype(jnp.bfloat16)
    out_ref[...] += jnp.dot(act, w2_ref[...],
                            preferred_element_type=jnp.float32)


# ---------------------------------- Wrapper -----------------------------------
def transformer_block_forward(x, start_pos, mask, cache_k, cache_v, params,
                              n_heads, norm_eps, *,
                              s_tile=None, k_tile=None, kv_tile=None,
                              hf_tile=None, row_tile=None):
    B, S, D = x.shape
    H = n_heads
    Hd = D // H
    max_seq = cache_k.shape[1]
    T = start_pos + S
    Hf = params["w2"].shape[0]
    # The standard llama causal mask (triu(-inf, start_pos+1), or None at
    # decode) is generated in-kernel from start_pos; the dense mask is unused.
    del mask

    # Heads are addressed as lane-dense Hd-wide column blocks of (B, S, D) /
    # (B, T, D) views (no cache transposes).
    assert Hd % 128 == 0 or Hd == D, "head_dim must be a multiple of 128"

    s_tile = s_tile or _pick_tile(S, 256, 8)
    k_tile = k_tile or _pick_tile(D, 512, 128)
    kv_tile = kv_tile or _pick_tile(max_seq, 512, 8)
    hf_tile = hf_tile or _pick_tile(Hf, 512, 128)
    rows = B * S
    row_tile = row_tile or _pick_tile(rows, 256, 16)
    assert S % s_tile == 0 and D % k_tile == 0 and Hf % hf_tile == 0
    assert max_seq % kv_tile == 0 and rows % row_tile == 0
    n_s, n_k, n_hf = S // s_tile, D // k_tile, Hf // hf_tile
    n_kv = -(-T // kv_tile)           # trailing cache rows are causally masked

    # Fused / reshaped bf16 weights (one-time transform in a real model).
    wqkv = jnp.concatenate([params["wq"], params["wk"], params["wv"]],
                           axis=1).astype(jnp.bfloat16)              # (D, 3D)
    wo_b = params["wo"].astype(jnp.bfloat16)                         # (D, D)
    w13 = jnp.concatenate(
        [params["w1"].reshape(D, n_hf, hf_tile).transpose(1, 0, 2),
         params["w3"].reshape(D, n_hf, hf_tile).transpose(1, 0, 2)],
        axis=-1).astype(jnp.bfloat16)                                # (n_hf, D, 2hf)
    w2_b = params["w2"].astype(jnp.bfloat16)                         # (Hf, D)

    # bf16 RoPE tables (S, 2D): [q-heads | k-heads], interleaved pairs.
    inv_freq = 1.0 / (10000.0 ** (jnp.arange(0, Hd, 2, dtype=jnp.float32) / Hd))
    tpos = jnp.arange(start_pos, start_pos + S, dtype=jnp.float32)
    ang = jnp.outer(tpos, inv_freq)                                  # (S, Hd/2)
    cos_h = jnp.repeat(jnp.cos(ang), 2, axis=-1)                     # (S, Hd)
    sin_h = jnp.repeat(jnp.sin(ang), 2, axis=-1)
    cos_qk = jnp.tile(cos_h, (1, 2 * H)).astype(jnp.bfloat16)        # (S, 2D)
    sin_qk = jnp.tile(sin_h, (1, 2 * H)).astype(jnp.bfloat16)

    # ---- Kernel A: RMSNorm + fused QKV projection (K-tiled) + RoPE ----------
    qkv_call = pl.pallas_call(
        functools.partial(qkv_rope_kernel, eps=norm_eps, dim=D,
                          q_scale=1.0 / math.sqrt(Hd)),
        grid=(B, n_s, n_k),
        in_specs=[
            pl.BlockSpec((None, s_tile, k_tile), lambda b, si, kk: (b, si, kk)),
            pl.BlockSpec((1, k_tile), lambda b, si, kk: (0, kk)),
            pl.BlockSpec((k_tile, 3 * D), lambda b, si, kk: (kk, 0)),
            pl.BlockSpec((s_tile, 2 * D), lambda b, si, kk: (si, 0)),
            pl.BlockSpec((s_tile, 2 * D), lambda b, si, kk: (si, 0)),
        ],
        out_specs=(
            pl.BlockSpec((None, s_tile, D), lambda b, si, kk: (b, si, 0)),
            pl.BlockSpec((None, s_tile, D), lambda b, si, kk: (b, si, 0)),
            pl.BlockSpec((None, s_tile, D), lambda b, si, kk: (b, si, 0)),
        ),
        out_shape=(
            jax.ShapeDtypeStruct((B, S, D), jnp.bfloat16),   # q (scaled, bf16)
            jax.ShapeDtypeStruct((B, S, D), jnp.float32),    # k (cache dtype)
            jax.ShapeDtypeStruct((B, S, D), jnp.float32),    # v (cache dtype)
        ),
        scratch_shapes=[pltpu.VMEM((s_tile, 3 * D), jnp.float32),
                        pltpu.VMEM((s_tile, 1), jnp.float32)],
        compiler_params=pltpu.CompilerParams(
            dimension_semantics=("parallel", "parallel", "arbitrary"),
            vmem_limit_bytes=_VMEM_LIMIT),
    )
    xq, xk, xv = qkv_call(x, params["attn_norm"], wqkv, cos_qk, sin_qk)

    # KV-cache write (glue).  Reshapes are free; NO cache transposes.
    # TODO(synk): alias the caches through the pallas_call
    # (input_output_aliases) so this update is truly in-place, and keep the
    # cache in bf16 to halve decode-time attention bandwidth.
    new_ck = jax.lax.dynamic_update_slice(
        cache_k, xk.reshape(B, S, H, Hd), (0, start_pos, 0, 0))
    new_cv = jax.lax.dynamic_update_slice(
        cache_v, xv.reshape(B, S, H, Hd), (0, start_pos, 0, 0))
    keys2d = new_ck.reshape(B, max_seq, D)      # native layout, free reshape
    vals2d = new_cv.reshape(B, max_seq, D)

    # ---- Kernel B1: flash attention over (B, S-tiles, H, KV-tiles) ----------
    attn_call = pl.pallas_call(
        functools.partial(flash_attn_kernel, start_pos=start_pos,
                          s_tile=s_tile, kv_tile=kv_tile),
        grid=(B, n_s, H, n_kv),
        in_specs=[
            pl.BlockSpec((None, s_tile, Hd), lambda b, si, h, t: (b, si, h)),
            pl.BlockSpec((None, kv_tile, Hd), lambda b, si, h, t: (b, t, h)),
            pl.BlockSpec((None, kv_tile, Hd), lambda b, si, h, t: (b, t, h)),
        ],
        out_specs=pl.BlockSpec((None, s_tile, Hd), lambda b, si, h, t: (b, si, h)),
        out_shape=jax.ShapeDtypeStruct((B, S, D), jnp.bfloat16),
        scratch_shapes=[pltpu.VMEM((s_tile, 1), jnp.float32),
                        pltpu.VMEM((s_tile, 1), jnp.float32),
                        pltpu.VMEM((s_tile, Hd), jnp.float32)],
        compiler_params=pltpu.CompilerParams(
            dimension_semantics=("parallel", "parallel", "arbitrary", "arbitrary"),
            vmem_limit_bytes=_VMEM_LIMIT),
    )
    ctx = attn_call(xq, keys2d, vals2d)          # (B, S, D) bf16, heads concatenated

    # ---- Kernel B2: Wo + residual + ffn_norm + gated MLP (Hf-tiled) + res ---
    x2 = x.reshape(rows, D)
    ctx2 = ctx.reshape(rows, D)
    # TODO(synk): at real dims also tile wo (D, D) instead of keeping it
    # VMEM-resident across the Hf axis.
    ffn_call = pl.pallas_call(
        functools.partial(wo_ffn_kernel, eps=norm_eps, hf_tile=hf_tile),
        grid=(rows // row_tile, n_hf),
        in_specs=[
            pl.BlockSpec((row_tile, D), lambda r, f: (r, 0)),
            pl.BlockSpec((row_tile, D), lambda r, f: (r, 0)),
            pl.BlockSpec((D, D), lambda r, f: (0, 0)),
            pl.BlockSpec((1, D), lambda r, f: (0, 0)),
            pl.BlockSpec((None, D, 2 * hf_tile), lambda r, f: (f, 0, 0)),
            pl.BlockSpec((hf_tile, D), lambda r, f: (f, 0)),
        ],
        out_specs=pl.BlockSpec((row_tile, D), lambda r, f: (r, 0)),
        out_shape=jax.ShapeDtypeStruct((rows, D), jnp.float32),
        scratch_shapes=[pltpu.VMEM((row_tile, D), jnp.bfloat16)],
        compiler_params=pltpu.CompilerParams(
            dimension_semantics=("parallel", "arbitrary"),
            vmem_limit_bytes=_VMEM_LIMIT),
    )
    out2d = ffn_call(x2, ctx2, wo_b, params["ffn_norm"], w13, w2_b)
    return out2d.reshape(B, S, D), new_ck, new_cv


# ----------------------------- Pure-JAX reference ------------------------------
def reference_forward(x, start_pos, mask, cache_k, cache_v, params, n_heads, eps):
    B, S, D = x.shape
    H = n_heads
    Hd = D // H

    def rms(v, w):
        return v * jax.lax.rsqrt(jnp.mean(v * v, -1, keepdims=True) + eps) * w

    hn = rms(x, params["attn_norm"][0])
    xq = (hn @ params["wq"]).reshape(B, S, H, Hd)
    xk = (hn @ params["wk"]).reshape(B, S, H, Hd)
    xv = (hn @ params["wv"]).reshape(B, S, H, Hd)

    inv_freq = 1.0 / (10000.0 ** (jnp.arange(0, Hd, 2, dtype=jnp.float32) / Hd))
    t = jnp.arange(start_pos, start_pos + S, dtype=jnp.float32)
    ang = jnp.outer(t, inv_freq)
    c = jnp.cos(ang)[None, :, None, :]
    s = jnp.sin(ang)[None, :, None, :]

    def rope(v):
        vr = v[..., 0::2]
        vi = v[..., 1::2]
        orr = vr * c - vi * s
        oii = vr * s + vi * c
        return jnp.stack([orr, oii], axis=-1).reshape(v.shape)

    xq, xk = rope(xq), rope(xk)
    ck = jax.lax.dynamic_update_slice(cache_k, xk, (0, start_pos, 0, 0))
    cv = jax.lax.dynamic_update_slice(cache_v, xv, (0, start_pos, 0, 0))
    T = start_pos + S
    keys = jnp.transpose(ck[:, :T], (0, 2, 1, 3))
    vals = jnp.transpose(cv[:, :T], (0, 2, 1, 3))
    q = jnp.transpose(xq, (0, 2, 1, 3))
    scores = jnp.einsum('bhsd,bhtd->bhst', q, keys) / math.sqrt(Hd)
    scores = scores + mask[None, None]
    p = jax.nn.softmax(scores, axis=-1)
    o = jnp.einsum('bhst,bhtd->bhsd', p, vals)
    o = jnp.transpose(o, (0, 2, 1, 3)).reshape(B, S, D)
    h = x + o @ params["wo"]
    hn2 = rms(h, params["ffn_norm"][0])
    ff = (jax.nn.silu(hn2 @ params["w1"]) * (hn2 @ params["w3"])) @ params["w2"]
    return h + ff, ck, cv


if __name__ == "__main__":
    # ModelArgs-like small config (head_dim kept at 128 for lane-dense blocks).
    B, S, D, H = 2, 16, 256, 2
    Hd = D // H                      # 128
    max_seq = 32
    start_pos = 0
    multiple_of = 256
    norm_eps = 1e-5
    hidden = int(2 * (4 * D) / 3)
    Hf = multiple_of * ((hidden + multiple_of - 1) // multiple_of)   # 768

    key = jax.random.PRNGKey(0)
    ks = jax.random.split(key, 8)
    scale = 0.05
    params = {
        "wq": jax.random.normal(ks[0], (D, D), jnp.float32) * scale,
        "wk": jax.random.normal(ks[1], (D, D), jnp.float32) * scale,
        "wv": jax.random.normal(ks[2], (D, D), jnp.float32) * scale,
        "wo": jax.random.normal(ks[3], (D, D), jnp.float32) * scale,
        "w1": jax.random.normal(ks[4], (D, Hf), jnp.float32) * scale,
        "w3": jax.random.normal(ks[5], (D, Hf), jnp.float32) * scale,
        "w2": jax.random.normal(ks[6], (Hf, D), jnp.float32) * scale,
        "attn_norm": jnp.ones((1, D), jnp.float32),
        "ffn_norm": jnp.ones((1, D), jnp.float32),
    }

    x = jax.random.normal(ks[7], (B, S, D), jnp.float32)
    cache_k = jnp.zeros((B, max_seq, H, Hd), jnp.float32)
    cache_v = jnp.zeros((B, max_seq, H, Hd), jnp.float32)

    # causal mask, as in llama: full(-inf) triu(diagonal=start_pos+1)
    T = start_pos + S
    mask = jnp.triu(jnp.full((S, T), float("-inf"), jnp.float32), k=start_pos + 1)

    # Small k_tile / kv_tile chosen to exercise the K-reduction and flash
    # KV-tile loops at these toy shapes.
    out, new_ck, new_cv = transformer_block_forward(
        x, start_pos, mask, cache_k, cache_v, params, n_heads=H,
        norm_eps=norm_eps, k_tile=128, kv_tile=8)
    out = jax.block_until_ready(out)

    ref_out, ref_ck, ref_cv = reference_forward(
        x, start_pos, mask, cache_k, cache_v, params, n_heads=H, eps=norm_eps)

    # bf16 MXU inputs / bf16 RoPE tables / bf16 ctx (f32 accumulation) ->
    # loosened tolerance vs the f32 reference.
    assert jnp.allclose(out, ref_out, atol=1e-1, rtol=1e-1), \
        float(jnp.max(jnp.abs(out - ref_out)))
    assert jnp.allclose(new_ck, ref_ck, atol=5e-2, rtol=5e-2), \
        float(jnp.max(jnp.abs(new_ck - ref_ck)))
    assert jnp.allclose(new_cv, ref_cv, atol=5e-2, rtol=5e-2), \
        float(jnp.max(jnp.abs(new_cv - ref_cv)))

    print("KERNEL_OK")
</pallas_src>

<mosaic_0001>
module attributes {stable_mosaic.version = 11 : i64} {
  func.func @qkv_rope_kernel(%arg0: i32, %arg1: i32, %arg2: i32, %arg3: memref<1x16x128xf32, #tpu.memory_space<vmem>>, %arg4: memref<1x128xf32, #tpu.memory_space<vmem>>, %arg5: memref<128x768xbf16, #tpu.memory_space<vmem>>, %arg6: memref<16x512xbf16, #tpu.memory_space<vmem>>, %arg7: memref<16x512xbf16, #tpu.memory_space<vmem>>, %arg8: memref<1x16x256xbf16, #tpu.memory_space<vmem>>, %arg9: memref<1x16x256xf32, #tpu.memory_space<vmem>>, %arg10: memref<1x16x256xf32, #tpu.memory_space<vmem>>, %arg11: memref<16x768xf32, #tpu.memory_space<vmem>>, %arg12: memref<16x1xf32, #tpu.memory_space<vmem>>) attributes {dimension_semantics = [#tpu.dimension_semantics<parallel>, #tpu.dimension_semantics<parallel>, #tpu.dimension_semantics<arbitrary>], iteration_bounds = array<i64: 2, 1, 2>, scalar_prefetch = 0 : i64, scratch_operands = 2 : i64, tpu.core_type = #tpu.core_type<tc>, window_params = [{transform_indices = @transform_0, window_bounds = array<i64: 1, 16, 128>}, {transform_indices = @transform_1, window_bounds = array<i64: 1, 128>}, {transform_indices = @transform_2, window_bounds = array<i64: 128, 768>}, {transform_indices = @transform_3, window_bounds = array<i64: 16, 512>}, {transform_indices = @transform_4, window_bounds = array<i64: 16, 512>}, {transform_indices = @transform_5, window_bounds = array<i64: 1, 16, 256>}, {transform_indices = @transform_6, window_bounds = array<i64: 1, 16, 256>}, {transform_indices = @transform_7, window_bounds = array<i64: 1, 16, 256>}]} {
    %c0_i32 = arith.constant 0 : i32
    %0 = arith.cmpi eq, %arg2, %c0_i32 : i32
    %1 = arith.extui %0 : i1 to i32
    %c0_i32_0 = arith.constant 0 : i32
    %2 = arith.cmpi ne, %1, %c0_i32_0 : i32
    scf.if %2 {
      %cst_17 = arith.constant 0.000000e+00 : f32
      %23 = vector.broadcast %cst_17 : f32 to vector<16x768xf32>
      %c0_18 = arith.constant 0 : index
      %c0_19 = arith.constant 0 : index
      %24 = vector.load %arg11[%c0_18, %c0_19] : memref<16x768xf32, #tpu.memory_space<vmem>>, vector<16x768xf32>
      tpu.vector_store %arg11[%c0_18, %c0_19], %23 {strides = array<i32>} : memref<16x768xf32, #tpu.memory_space<vmem>>, vector<16x768xf32>,
      %cst_20 = arith.constant 0.000000e+00 : f32
      %25 = vector.broadcast %cst_20 : f32 to vector<16x1xf32>
      %c0_21 = arith.constant 0 : index
      %c0_22 = arith.constant 0 : index
      %26 = vector.load %arg12[%c0_21, %c0_22] : memref<16x1xf32, #tpu.memory_space<vmem>>, vector<16x1xf32>
      tpu.vector_store %arg12[%c0_21, %c0_22], %25 {strides = array<i32>} : memref<16x1xf32, #tpu.memory_space<vmem>>, vector<16x1xf32>,
    } else {
    }
    %c0 = arith.constant 0 : index
    %c0_1 = arith.constant 0 : index
    %c0_2 = arith.constant 0 : index
    %3 = vector.load %arg3[%c0, %c0_1, %c0_2] : memref<1x16x128xf32, #tpu.memory_space<vmem>>, vector<1x16x128xf32>
    %4 = vector.shape_cast %3 : vector<1x16x128xf32> to vector<16x128xf32>
    %c0_3 = arith.constant 0 : index
    %c0_4 = arith.constant 0 : index
    %5 = vector.load %arg12[%c0_3, %c0_4] : memref<16x1xf32, #tpu.memory_space<vmem>>, vector<16x1xf32>
    %6 = arith.mulf %4, %4 : vector<16x128xf32>
    %cst = arith.constant dense<0.000000e+00> : vector<16xf32>
    %7 = vector.multi_reduction <add>, %6, %cst [1] : vector<16x128xf32> to vector<16xf32>
    %8 = vector.shape_cast %7 : vector<16xf32> to vector<16x1xf32>
    %9 = arith.addf %5, %8 : vector<16x1xf32>
    %c0_5 = arith.constant 0 : index
    %c0_6 = arith.constant 0 : index
    %10 = vector.load %arg12[%c0_5, %c0_6] : memref<16x1xf32, #tpu.memory_space<vmem>>, vector<16x1xf32>
    tpu.vector_store %arg12[%c0_5, %c0_6], %9 {strides = array<i32>} : memref<16x1xf32, #tpu.memory_space<vmem>>, vector<16x1xf32>,
    %c0_7 = arith.constant 0 : index
    %c0_8 = arith.constant 0 : index
    %11 = vector.load %arg4[%c0_7, %c0_8] : memref<1x128xf32, #tpu.memory_space<vmem>>, vector<1x128xf32>
    %12 = vector.broadcast %11 : vector<1x128xf32> to vector<16x128xf32>
    %13 = arith.mulf %4, %12 : vector<16x128xf32>
    %14 = arith.truncf %13 : vector<16x128xf32> to vector<16x128xbf16>
    %c0_9 = arith.constant 0 : index
    %c0_10 = arith.constant 0 : index
    %15 = vector.load %arg11[%c0_9, %c0_10] : memref<16x768xf32, #tpu.memory_space<vmem>>, vector<16x768xf32>
    %c0_11 = arith.constant 0 : index
    %c0_12 = arith.constant 0 : index
    %16 = vector.load %arg5[%c0_11, %c0_12] : memref<128x768xbf16, #tpu.memory_space<vmem>>, vector<128x768xbf16>
    %cst_13 = arith.constant dense<0.000000e+00> : vector<16x768xf32>
    %17 = tpu.matmul %14, %16, %cst_13 {dimension_numbers = #tpu.dot_dimension_numbers<[1], [0], [0], [1], [0, 0, 1, 1], [], []>} : vector<16x128xbf16>, vector<128x768xbf16>, vector<16x768xf32> -> vector<16x768xf32>
    %18 = arith.addf %15, %17 : vector<16x768xf32>
    %c0_14 = arith.constant 0 : index
    %c0_15 = arith.constant 0 : index
    %19 = vector.load %arg11[%c0_14, %c0_15] : memref<16x768xf32, #tpu.memory_space<vmem>>, vector<16x768xf32>
    tpu.vector_store %arg11[%c0_14, %c0_15], %18 {strides = array<i32>} : memref<16x768xf32, #tpu.memory_space<vmem>>, vector<16x768xf32>,
    %c1_i32 = arith.constant 1 : i32
    %20 = arith.cmpi eq, %arg2, %c1_i32 : i32
    %21 = arith.extui %20 : i1 to i32
    %c0_i32_16 = arith.constant 0 : i32
    %22 = arith.cmpi ne, %21, %c0_i32_16 : i32
    scf.if %22 {
      %c0_17 = arith.constant 0 : index
      %c0_18 = arith.constant 0 : index
      %23 = vector.load %arg12[%c0_17, %c0_18] : memref<16x1xf32, #tpu.memory_space<vmem>>, vector<16x1xf32>
      %cst_19 = arith.constant 3.906250e-03 : f32
      %24 = vector.broadcast %cst_19 : f32 to vector<16x1xf32>
      %25 = arith.mulf %23, %24 : vector<16x1xf32>
      %cst_20 = arith.constant 9.99999974E-6 : f32
      %26 = vector.broadcast %cst_20 : f32 to vector<16x1xf32>
      %27 = arith.addf %25, %26 : vector<16x1xf32>
      %28 = math.rsqrt %27 : vector<16x1xf32>
      %c0_21 = arith.constant 0 : index
      %c0_22 = arith.constant 0 : index
      %29 = vector.load %arg11[%c0_21, %c0_22] : memref<16x768xf32, #tpu.memory_space<vmem>>, vector<16x768xf32>
      %30 = vector.broadcast %28 : vector<16x1xf32> to vector<16x768xf32>
      %31 = arith.mulf %29, %30 : vector<16x768xf32>
      %32 = vector.extract_strided_slice %31 {offsets = [0, 0], sizes = [16, 512], strides = [1, 1]} : vector<16x768xf32> to vector<16x512xf32>
      %33 = tpu.iota {dimensions = array<i32: 1>} : vector<16x512xi32>
      %c2_i32 = arith.constant 2 : i32
      %c0_i32_23 = arith.constant 0 : i32
      %34 = arith.cmpi eq, %c2_i32, %c0_i32_23 : i32
      %c1_i32_24 = arith.constant 1 : i32
      %35 = arith.select %34, %c1_i32_24, %c2_i32 : i32
      %36 = vector.broadcast %35 : i32 to vector<16x512xi32>
      %37 = arith.remsi %33, %36 : vector<16x512xi32>
      %c0_i32_25 = arith.constant 0 : i32
      %38 = vector.broadcast %c0_i32_25 : i32 to vector<16x512xi32>
      %39 = arith.cmpi ne, %37, %38 : vector<16x512xi32>
      %c0_i32_26 = arith.constant 0 : i32
      %40 = vector.broadcast %c0_i32_26 : i32 to vector<16x512xi32>
      %41 = arith.cmpi slt, %37, %40 : vector<16x512xi32>
      %c0_i32_27 = arith.constant 0 : i32
      %42 = arith.cmpi slt, %35, %c0_i32_27 : i32
      %43 = vector.broadcast %42 : i1 to vector<16x512xi1>
      %44 = vector.broadcast %43 : vector<16x512xi1> to vector<16x512xi1>
      %45 = arith.xori %41, %44 : vector<16x512xi1>
      %46 = arith.andi %45, %39 : vector<16x512xi1>
      %47 = vector.broadcast %35 : i32 to vector<16x512xi32>
      %48 = arith.addi %37, %47 : vector<16x512xi32>
      %49 = arith.select %46, %48, %37 : vector<16x512xi1>, vector<16x512xi32>
      %c0_i32_28 = arith.constant 0 : i32
      %50 = vector.broadcast %c0_i32_28 : i32 to vector<16x512xi32>
      %51 = arith.cmpi eq, %49, %50 : vector<16x512xi32>
      %c511_i32 = arith.constant 511 : i32
      %52 = tpu.dynamic_rotate %32 by %c511_i32 dim 1 : vector<16x512xf32>, i32 -> vector<16x512xf32>
      %cst_29 = arith.constant 0.000000e+00 : f32
      %53 = vector.broadcast %cst_29 : f32 to vector<16x512xf32>
      %54 = arith.subf %53, %52 : vector<16x512xf32>
      %c1_i32_30 = arith.constant 1 : i32
      %55 = tpu.dynamic_rotate %32 by %c1_i32_30 dim 1 : vector<16x512xf32>, i32 -> vector<16x512xf32>
      %56 = arith.select %51, %54, %55 : vector<16x512xi1>, vector<16x512xf32>
      %c0_31 = arith.constant 0 : index
      %c0_32 = arith.constant 0 : index
      %57 = vector.load %arg6[%c0_31, %c0_32] : memref<16x512xbf16, #tpu.memory_space<vmem>>, vector<16x512xbf16>
      %58 = arith.extf %57 : vector<16x512xbf16> to vector<16x512xf32>
      %59 = arith.mulf %32, %58 : vector<16x512xf32>
      %c0_33 = arith.constant 0 : index
      %c0_34 = arith.constant 0 : index
      %60 = vector.load %arg7[%c0_33, %c0_34] : memref<16x512xbf16, #tpu.memory_space<vmem>>, vector<16x512xbf16>
      %61 = arith.extf %60 : vector<16x512xbf16> to vector<16x512xf32>
      %62 = arith.mulf %56, %61 : vector<16x512xf32>
      %63 = arith.addf %59, %62 : vector<16x512xf32>
      %64 = vector.extract_strided_slice %63 {offsets = [0, 0], sizes = [16, 256], strides = [1, 1]} : vector<16x512xf32> to vector<16x256xf32>
      %cst_35 = arith.constant 0.0883883461 : f32
      %65 = vector.broadcast %cst_35 : f32 to vector<16x256xf32>
      %66 = arith.mulf %64, %65 : vector<16x256xf32>
      %67 = arith.truncf %66 : vector<16x256xf32> to vector<16x256xbf16>
      %c0_36 = arith.constant 0 : index
      %c0_37 = arith.constant 0 : index
      %c0_38 = arith.constant 0 : index
      %68 = vector.load %arg8[%c0_36, %c0_37, %c0_38] : memref<1x16x256xbf16, #tpu.memory_space<vmem>>, vector<1x16x256xbf16>
      %69 = vector.shape_cast %68 : vector<1x16x256xbf16> to vector<16x256xbf16>
      %70 = vector.shape_cast %67 : vector<16x256xbf16> to vector<1x16x256xbf16>
      tpu.vector_store %arg8[%c0_36, %c0_37, %c0_38], %70 {strides = array<i32>} : memref<1x16x256xbf16, #tpu.memory_space<vmem>>, vector<1x16x256xbf16>,
      %71 = vector.extract_strided_slice %63 {offsets = [0, 256], sizes = [16, 256], strides = [1, 1]} : vector<16x512xf32> to vector<16x256xf32>
      %c0_39 = arith.constant 0 : index
      %c0_40 = arith.constant 0 : index
      %c0_41 = arith.constant 0 : index
      %72 = vector.load %arg9[%c0_39, %c0_40, %c0_41] : memref<1x16x256xf32, #tpu.memory_space<vmem>>, vector<1x16x256xf32>
      %73 = vector.shape_cast %72 : vector<1x16x256xf32> to vector<16x256xf32>
      %74 = vector.shape_cast %71 : vector<16x256xf32> to vector<1x16x256xf32>
      tpu.vector_store %arg9[%c0_39, %c0_40, %c0_41], %74 {strides = array<i32>} : memref<1x16x256xf32, #tpu.memory_space<vmem>>, vector<1x16x256xf32>,
      %75 = vector.extract_strided_slice %31 {offsets = [0, 512], sizes = [16, 256], strides = [1, 1]} : vector<16x768xf32> to vector<16x256xf32>
      %c0_42 = arith.constant 0 : index
      %c0_43 = arith.constant 0 : index
      %c0_44 = arith.constant 0 : index
      %76 = vector.load %arg10[%c0_42, %c0_43, %c0_44] : memref<1x16x256xf32, #tpu.memory_space<vmem>>, vector<1x16x256xf32>
      %77 = vector.shape_cast %76 : vector<1x16x256xf32> to vector<16x256xf32>
      %78 = vector.shape_cast %75 : vector<16x256xf32> to vector<1x16x256xf32>
      tpu.vector_store %arg10[%c0_42, %c0_43, %c0_44], %78 {strides = array<i32>} : memref<1x16x256xf32, #tpu.memory_space<vmem>>, vector<1x16x256xf32>,
    } else {
    }
    return
  }
  func.func @transform_0(%arg0: i32, %arg1: i32, %arg2: i32) -> (i32, i32, i32) {
    %c0_i32 = arith.constant 0 : i32
    return %arg0, %arg1, %arg2 : i32, i32, i32
  }
  func.func @transform_1(%arg0: i32, %arg1: i32, %arg2: i32) -> (i32, i32) {
    %c0_i32 = arith.constant 0 : i32
    %c0_i32_0 = arith.constant 0 : i32
    return %c0_i32, %arg2 : i32, i32
  }
  func.func @transform_2(%arg0: i32, %arg1: i32, %arg2: i32) -> (i32, i32) {
    %c0_i32 = arith.constant 0 : i32
    %c0_i32_0 = arith.constant 0 : i32
    return %arg2, %c0_i32 : i32, i32
  }
  func.func @transform_3(%arg0: i32, %arg1: i32, %arg2: i32) -> (i32, i32) {
    %c0_i32 = arith.constant 0 : i32
    %c0_i32_0 = arith.constant 0 : i32
    return %arg1, %c0_i32 : i32, i32
  }
  func.func @transform_4(%arg0: i32, %arg1: i32, %arg2: i32) -> (i32, i32) {
    %c0_i32 = arith.constant 0 : i32
    %c0_i32_0 = arith.constant 0 : i32
    return %arg1, %c0_i32 : i32, i32
  }
  func.func @transform_5(%arg0: i32, %arg1: i32, %arg2: i32) -> (i32, i32, i32) {
    %c0_i32 = arith.constant 0 : i32
    %c0_i32_0 = arith.constant 0 : i32
    return %arg0, %arg1, %c0_i32 : i32, i32, i32
  }
  func.func @transform_6(%arg0: i32, %arg1: i32, %arg2: i32) -> (i32, i32, i32) {
    %c0_i32 = arith.constant 0 : i32
    %c0_i32_0 = arith.constant 0 : i32
    return %arg0, %arg1, %c0_i32 : i32, i32, i32
  }
  func.func @transform_7(%arg0: i32, %arg1: i32, %arg2: i32) -> (i32, i32, i32) {
    %c0_i32 = arith.constant 0 : i32
    %c0_i32_0 = arith.constant 0 : i32
    return %arg0, %arg1, %c0_i32 : i32, i32, i32
  }
}

</mosaic_0001>

<llo_original>
// kernel: tpu_custom_call.1
$region0: #{tpu_custom_call.1}
  #allocation0 [shape = 'u32[]', space=smem, size = 0x4, offset = 0x4, fixed_abs, tag = 'smem constant byte address 0x4 - core index']
  #allocation1 [shape = 'u32[144,128]{1,0:T(1,128)}', space=vmem, size = 0x12000, scoped, tag = 'internal scratch']
  #allocation2 [shape = 'f32[16,768]{1,0:T(8,128)}', space=vmem, size = 0xc000, scoped, tag = 'scratch operand']
  #allocation3 [shape = 'f32[16,1]{1,0:T(8,128)}', space=vmem, size = 0x2000, scoped, tag = 'scratch operand']
  %s0 = inlined_call_operand.hbm [shape: f32[2,16,256], index: 0, kind: input, shape index: {}]
  %s1 = inlined_call_operand.vmem [shape: f32[1,256], index: 1, kind: input, shape index: {}]
  %s2 = inlined_call_operand.hbm [shape: bf16[256,768], index: 2, kind: input, shape index: {}]
  %s3 = inlined_call_operand.hbm [shape: bf16[16,512], index: 3, kind: input, shape index: {}]
  %s4 = inlined_call_operand.hbm [shape: bf16[16,512], index: 4, kind: input, shape index: {}]
  %s5 = inlined_call_operand.hbm [shape: bf16[2,16,256], index: 5, kind: output, shape index: {0}]
  %s6 = inlined_call_operand.hbm [shape: f32[2,16,256], index: 6, kind: output, shape index: {1}]
  %s7 = inlined_call_operand.hbm [shape: f32[2,16,256], index: 7, kind: output, shape index: {2}]
  %8 = xla_tuple %s5, %s6, %s7
  %s9 = sld [smem:[#allocation0]]
  $region93: #{tpu_custom_call.1} parent=0
    _
  %s11 = ssub.s32 1, %s9
  %s12 = scalar_select 0, %s11, %s9
  $region1: #{tpu_custom_call.1} parent=0
    #allocation4 [shape = 'u8[16384]{0}', space=vmem, size = 0x4000, scoped, tag = 'input window, operand 0']
    #allocation5 [shape = 's32[2]{0}', space=sflag, size = 0x8, scoped, tag = 'scoped memory for tpu_custom_call.1']
    #allocation6 [shape = 's32[2]{0}', space=sflag, size = 0x8, scoped, tag = 'scoped memory for tpu_custom_call.1']
    #allocation7 [shape = 'u8[393216]{0}', space=vmem, size = 0x60000, scoped, tag = 'input window, operand 2']
    #allocation8 [shape = 's32[2]{0}', space=sflag, size = 0x8, scoped, tag = 'scoped memory for tpu_custom_call.1']
    #allocation9 [shape = 'u8[16384]{0}', space=vmem, size = 0x4000, scoped, tag = 'input window, operand 3, single buffered']
    #allocation10 [shape = 'u8[16384]{0}', space=vmem, size = 0x4000, scoped, tag = 'input window, operand 4, single buffered']
    #allocation11 [shape = 's32[1]{0}', space=sflag, size = 0x4, scoped, tag = 'scoped memory for tpu_custom_call.1']
    #allocation12 [shape = 'u8[16384]{0}', space=vmem, size = 0x4000, scoped, tag = 'output window, operand 0']
    #allocation13 [shape = 'u8[32768]{0}', space=vmem, size = 0x8000, scoped, tag = 'output window, operand 1']
    #allocation14 [shape = 's32[2]{0}', space=sflag, size = 0x8, scoped, tag = 'scoped memory for tpu_custom_call.1']
    #allocation15 [shape = 'u8[32768]{0}', space=vmem, size = 0x8000, scoped, tag = 'output window, operand 2']
    %13 = vsyncpa [#allocation5], 0
    %s14 = scalar_lea.sflag [#allocation5], 1
    %15 = vsyncpa %s14, 0
    %16 = vsyncpa [#allocation8], 0
    %s17 = scalar_lea.sflag [#allocation8], 1
    %18 = vsyncpa %s17, 0
    %19 = vsyncpa [#allocation11], 0
    %20 = vsyncpa [#allocation6], 0
    %s21 = scalar_lea.sflag [#allocation6], 1
    %22 = vsyncpa %s21, 0
    %23 = vsyncpa [#allocation14], 0
    %s24 = scalar_lea.sflag [#allocation14], 1
    %25 = vsyncpa %s24, 0
    loop: start=0, step=1, limit=6
    $region2: #{tpu_custom_call.1} parent=1 // loop_pre_header
      _
    $region3: #{tpu_custom_call.1} parent=1 // loop_header
      %s27 = sphi 0, %s31
      %p28 = scmp.ge.s32.totalorder %s27, 6
      %s34 = sphi 0, %s53
      %s35 = sphi 0, %s49
      %s36 = sphi 0, %s45
      %s37 = sphi 0, %s34
      %s38 = sphi 0, %s35
      %s39 = sphi 0, %s36
      %s40 = sphi 0, %s37
      %s41 = sphi 0, %s38
      %s42 = sphi 0, %s39
      %s60 = sphi 0, %s62
      %s63 = sphi 0, %s60
      %s64 = sphi 0, %s63
      %s80 = sphi 0, %s64
      %s86 = sphi 0, %s88
      %s89 = sphi 0, %s86
      %s90 = sphi 0, %s89
      %s106 = sphi 0, %s90
      %s112 = sphi 0, %s114
      %s115 = sphi 0, %s112
      %s116 = sphi 0, %s115
      %s132 = sphi 0, %s116
      %s138 = sphi 0, %s140
      %s141 = sphi 0, %s138
      %s142 = sphi 0, %s141
      %s158 = sphi 0, %s142
      %s164 = sphi 0, %s166
      %s167 = sphi 0, %s164
      %s168 = sphi 0, %s167
      %s184 = sphi 0, %s168
      %s192 = sphi 0, %s194
      %s195 = sphi 0, %s192
      %s196 = sphi 0, %s195
      %s212 = sphi 0, %s196
      %s220 = sphi 0, %s222
      %s223 = sphi 0, %s220
      %s224 = sphi 0, %s223
      %s240 = sphi 0, %s224
      %s248 = sphi 0, %s250
      %s251 = sphi 0, %s248
      %s252 = sphi 0, %s251
      %s268 = sphi 0, %s252
    $region4: #{tpu_custom_call.1} parent=1 // loop_header_branch
      %30 = sbr.rel (%p28) target = $region8
    $region5: #{tpu_custom_call.1} parent=1 // loop_body
      %s32 = ssub.s32 %s27, 1
      %s33 = ssub.s32 %s27, 2
      %s43 = sadd.s32 1, %s36
      %p44 = scmp.ge.s32.totalorder %s43, 2
      %s45 = scalar_select %p44, 0, %s43
      %s46 = sadd.s32 1, %s35
      %s47 = scalar_select %p44, %s46, %s35
      %p48 = scmp.ge.s32.totalorder %s47, 1
      %s49 = scalar_select %p48, 0, %s47
      %s50 = sadd.s32 1, %s34
      %s51 = scalar_select %p48, %s50, %s34
      %p52 = scmp.ge.s32.totalorder %s51, 2
      %s53 = scalar_select %p52, 0, %s51
      %s54 = ssub.s32 %s34, %s53
      %s55 = ssub.s32 %s35, %s49
      %s56 = sor.u32 %s54, %s55
      %s57 = ssub.s32 %s36, %s45
      %s58 = sor.u32 %s56, %s57
      %p59 = scmp.eq.s32.totalorder %s58, 0
      %s61 = sadd.s32 %s60, 1
      %s62 = scalar_select %p59, %s60, %s61
      %p65 = pneg %p59
      %p66 = scmp.eq.s32.totalorder %s27, 3
      %p67 = por %p65, %p66
      %p68 = scmp.ne.s32.totalorder %s60, %s63
      %p69 = scmp.eq.s32.totalorder %s27, 0
      %p70 = por %p68, %p69
      %p71 = scmp.ne.s32.totalorder %s60, %s63
      %p72 = scmp.eq.s32.totalorder %s32, 3
      %p73 = por %p71, %p72
      %p74 = scmp.ne.s32.totalorder %s63, %s64
      %p75 = scmp.eq.s32.totalorder %s32, 0
      %p76 = por %p74, %p75
      %p77 = scmp.ne.s32.totalorder %s63, %s64
      %p78 = scmp.eq.s32.totalorder %s33, 3
      %p79 = por %p77, %p78
      %p81 = scmp.ne.s32.totalorder %s64, %s80
      %p82 = scmp.eq.s32.totalorder %s33, 0
      %p83 = por %p81, %p82
      %s84 = ssub.s32 %s36, %s45
      %p85 = scmp.eq.s32.totalorder %s84, 0
      %s87 = sadd.s32 %s86, 1
      %s88 = scalar_select %p85, %s86, %s87
      %p91 = pneg %p85
      %p92 = scmp.eq.s32.totalorder %s27, 3
      %p93 = por %p91, %p92
      %p94 = scmp.ne.s32.totalorder %s86, %s89
      %p95 = scmp.eq.s32.totalorder %s27, 0
      %p96 = por %p94, %p95
      %p97 = scmp.ne.s32.totalorder %s86, %s89
      %p98 = scmp.eq.s32.totalorder %s32, 3
      %p99 = por %p97, %p98
      %p100 = scmp.ne.s32.totalorder %s89, %s90
      %p101 = scmp.eq.s32.totalorder %s32, 0
      %p102 = por %p100, %p101
      %p103 = scmp.ne.s32.totalorder %s89, %s90
      %p104 = scmp.eq.s32.totalorder %s33, 3
      %p105 = por %p103, %p104
      %p107 = scmp.ne.s32.totalorder %s90, %s106
      %p108 = scmp.eq.s32.totalorder %s33, 0
      %p109 = por %p107, %p108
      %s110 = ssub.s32 %s36, %s45
      %p111 = scmp.eq.s32.totalorder %s110, 0
      %s113 = sadd.s32 %s112, 1
      %s114 = scalar_select %p111, %s112, %s113
      %p117 = pneg %p111
      %p118 = scmp.eq.s32.totalorder %s27, 3
      %p119 = por %p117, %p118
      %p120 = scmp.ne.s32.totalorder %s112, %s115
      %p121 = scmp.eq.s32.totalorder %s27, 0
      %p122 = por %p120, %p121
      %p123 = scmp.ne.s32.totalorder %s112, %s115
      %p124 = scmp.eq.s32.totalorder %s32, 3
      %p125 = por %p123, %p124
      %p126 = scmp.ne.s32.totalorder %s115, %s116
      %p127 = scmp.eq.s32.totalorder %s32, 0
      %p128 = por %p126, %p127
      %p129 = scmp.ne.s32.totalorder %s115, %s116
      %p130 = scmp.eq.s32.totalorder %s33, 3
      %p131 = por %p129, %p130
      %p133 = scmp.ne.s32.totalorder %s116, %s132
      %p134 = scmp.eq.s32.totalorder %s33, 0
      %p135 = por %p133, %p134
      %s136 = ssub.s32 %s35, %s49
      %p137 = scmp.eq.s32.totalorder %s136, 0
      %s139 = sadd.s32 %s138, 1
      %s140 = scalar_select %p137, %s138, %s139
      %p143 = pneg %p137
      %p144 = scmp.eq.s32.totalorder %s27, 3
      %p145 = por %p143, %p144
      %p146 = scmp.ne.s32.totalorder %s138, %s141
      %p147 = scmp.eq.s32.totalorder %s27, 0
      %p148 = por %p146, %p147
      %p149 = scmp.ne.s32.totalorder %s138, %s141
      %p150 = scmp.eq.s32.totalorder %s32, 3
      %p151 = por %p149, %p150
      %p152 = scmp.ne.s32.totalorder %s141, %s142
      %p153 = scmp.eq.s32.totalorder %s32, 0
      %p154 = por %p152, %p153
      %p155 = scmp.ne.s32.totalorder %s141, %s142
      %p156 = scmp.eq.s32.totalorder %s33, 3
      %p157 = por %p155, %p156
      %p159 = scmp.ne.s32.totalorder %s142, %s158
      %p160 = scmp.eq.s32.totalorder %s33, 0
      %p161 = por %p159, %p160
      %s162 = ssub.s32 %s35, %s49
      %p163 = scmp.eq.s32.totalorder %s162, 0
      %s165 = sadd.s32 %s164, 1
      %s166 = scalar_select %p163, %s164, %s165
      %p169 = pneg %p163
      %p170 = scmp.eq.s32.totalorder %s27, 3
      %p171 = por %p169, %p170
      %p172 = scmp.ne.s32.totalorder %s164, %s167
      %p173 = scmp.eq.s32.totalorder %s27, 0
      %p174 = por %p172, %p173
      %p175 = scmp.ne.s32.totalorder %s164, %s167
      %p176 = scmp.eq.s32.totalorder %s32, 3
      %p177 = por %p175, %p176
      %p178 = scmp.ne.s32.totalorder %s167, %s168
      %p179 = scmp.eq.s32.totalorder %s32, 0
      %p180 = por %p178, %p179
      %p181 = scmp.ne.s32.totalorder %s167, %s168
      %p182 = scmp.eq.s32.totalorder %s33, 3
      %p183 = por %p181, %p182
      %p185 = scmp.ne.s32.totalorder %s168, %s184
      %p186 = scmp.eq.s32.totalorder %s33, 0
      %p187 = por %p185, %p186
      %s188 = ssub.s32 %s34, %s53
      %s189 = ssub.s32 %s35, %s49
      %s190 = sor.u32 %s188, %s189
      %p191 = scmp.eq.s32.totalorder %s190, 0
      %s193 = sadd.s32 %s192, 1
      %s194 = scalar_select %p191, %s192, %s193
      %p197 = pneg %p191
      %p198 = scmp.eq.s32.totalorder %s27, 3
      %p199 = por %p197, %p198
      %p200 = scmp.ne.s32.totalorder %s192, %s195
      %p201 = scmp.eq.s32.totalorder %s27, 0
      %p202 = por %p200, %p201
      %p203 = scmp.ne.s32.totalorder %s192, %s195
      %p204 = scmp.eq.s32.totalorder %s32, 3
      %p205 = por %p203, %p204
      %p206 = scmp.ne.s32.totalorder %s195, %s196
      %p207 = scmp.eq.s32.totalorder %s32, 0
      %p208 = por %p206, %p207
      %p209 = scmp.ne.s32.totalorder %s195, %s196
      %p210 = scmp.eq.s32.totalorder %s33, 3
      %p211 = por %p209, %p210
      %p213 = scmp.ne.s32.totalorder %s196, %s212
      %p214 = scmp.eq.s32.totalorder %s33, 0
      %p215 = por %p213, %p214
      %s216 = ssub.s32 %s34, %s53
      %s217 = ssub.s32 %s35, %s49
      %s218 = sor.u32 %s216, %s217
      %p219 = scmp.eq.s32.totalorder %s218, 0
      %s221 = sadd.s32 %s220, 1
      %s222 = scalar_select %p219, %s220, %s221
      %p225 = pneg %p219
      %p226 = scmp.eq.s32.totalorder %s27, 3
      %p227 = por %p225, %p226
      %p228 = scmp.ne.s32.totalorder %s220, %s223
      %p229 = scmp.eq.s32.totalorder %s27, 0
      %p230 = por %p228, %p229
      %p231 = scmp.ne.s32.totalorder %s220, %s223
      %p232 = scmp.eq.s32.totalorder %s32, 3
      %p233 = por %p231, %p232
      %p234 = scmp.ne.s32.totalorder %s223, %s224
      %p235 = scmp.eq.s32.totalorder %s32, 0
      %p236 = por %p234, %p235
      %p237 = scmp.ne.s32.totalorder %s223, %s224
      %p238 = scmp.eq.s32.totalorder %s33, 3
      %p239 = por %p237, %p238
      %p241 = scmp.ne.s32.totalorder %s224, %s240
      %p242 = scmp.eq.s32.totalorder %s33, 0
      %p243 = por %p241, %p242
      %s244 = ssub.s32 %s34, %s53
      %s245 = ssub.s32 %s35, %s49
      %s246 = sor.u32 %s244, %s245
      %p247 = scmp.eq.s32.totalorder %s246, 0
      %s249 = sadd.s32 %s248, 1
      %s250 = scalar_select %p247, %s248, %s249
      %p253 = pneg %p247
      %p254 = scmp.eq.s32.totalorder %s27, 3
      %p255 = por %p253, %p254
      %p256 = scmp.ne.s32.totalorder %s248, %s251
      %p257 = scmp.eq.s32.totalorder %s27, 0
      %p258 = por %p256, %p257
      %p259 = scmp.ne.s32.totalorder %s248, %s251
      %p260 = scmp.eq.s32.totalorder %s32, 3
      %p261 = por %p259, %p260
      %p262 = scmp.ne.s32.totalorder %s251, %s252
      %p263 = scmp.eq.s32.totalorder %s32, 0
      %p264 = por %p262, %p263
      %p265 = scmp.ne.s32.totalorder %s251, %s252
      %p266 = scmp.eq.s32.totalorder %s33, 3
      %p267 = por %p265, %p266
      %p269 = scmp.ne.s32.totalorder %s252, %s268
      %p270 = scmp.eq.s32.totalorder %s33, 0
      %p271 = por %p269, %p270
      %p272 = scmp.le.s32.totalorder 1, %s27
      %p273 = scmp.lt.s32.totalorder %s27, 5
      %p274 = pnand %p272, %p273
      %p275 = pneg %p274
      // Predicated region
      $region9: #{tpu_custom_call.1} parent=5 // pred_check
        _
      $region10: #{tpu_custom_call.1} parent=5 // pred_check_branch
        %277 = sbr.rel (%p274) target = $region12
      $region11: #{tpu_custom_call.1} parent=5 // pred_region
        %s278 = ssub.s32 %s27, 1
        // Predicated region
        $region13: #{tpu_custom_call.1} parent=11 // pred_check
          %p279 = pneg %p154
        $region14: #{tpu_custom_call.1} parent=11 // pred_check_branch
          %281 = sbr.rel (%p279) target = $region16
        $region15: #{tpu_custom_call.1} parent=11 // pred_region
          %s282 = smul.u32 2, %s38
          %s284 = ssub.s32 512, 512
          %285 = vsyncadd [#allocation8], %s284
          %s286 = smul.addr %s282, 4
          %s287 = smul.addr %s286, 64
          %s288 = scalar_lea.hbm %s3, %s287
          %s289 = sshll.u32 [#allocation9], 4
          %s290 = int_to_ptr.vmem [resolvable:$true] %s289
          %295 = dma.hbm_to_vmem [thread:$0]  %s288, 512, %s290, [#allocation8], 256, 256, 16
        $region16: #{tpu_custom_call.1} parent=11 // pred_fallthru
          _
        // Predicated region
        $region17: #{tpu_custom_call.1} parent=11 // pred_check
          %p296 = pneg %p180
        $region18: #{tpu_custom_call.1} parent=11 // pred_check_branch
          %298 = sbr.rel (%p296) target = $region20
        $region19: #{tpu_custom_call.1} parent=11 // pred_region
          %s299 = smul.u32 2, %s38
          %s301 = ssub.s32 512, 512
          %302 = vsyncadd [#allocation11], %s301
          %s303 = smul.addr %s299, 4
          %s304 = smul.addr %s303, 64
          %s305 = scalar_lea.hbm %s4, %s304
          %s306 = sshll.u32 [#allocation10], 4
          %s307 = int_to_ptr.vmem [resolvable:$true] %s306
          %312 = dma.hbm_to_vmem [thread:$0]  %s305, 512, %s307, [#allocation11], 256, 256, 16
        $region20: #{tpu_custom_call.1} parent=11 // pred_fallthru
          _
      $region12: #{tpu_custom_call.1} parent=5 // pred_fallthru
        _
      %p313 = scmp.lt.s32.totalorder %s27, 4
      // Predicated region
      $region21: #{tpu_custom_call.1} parent=5 // pred_check
        %p314 = pneg %p313
      $region22: #{tpu_custom_call.1} parent=5 // pred_check_branch
        %316 = sbr.rel (%p314) target = $region24
      $region23: #{tpu_custom_call.1} parent=5 // pred_region
        // Predicated region
        $region25: #{tpu_custom_call.1} parent=23 // pred_check
          %p317 = pneg %p70
        $region26: #{tpu_custom_call.1} parent=23 // pred_check_branch
          %319 = sbr.rel (%p317) target = $region28
        $region27: #{tpu_custom_call.1} parent=23 // pred_region
          %s320 = sand.u32 %s60, 1
          %s321 = scalar_lea.sflag [#allocation5], %s320
          %s322 = sand.u32 %s60, 1
          %s323 = smul.addr %s322, 16
          %s324 = scalar_lea.vmem [#allocation4], %s323
          %s325 = smul.u32 2, %s35
          %s327 = ssub.s32 256, 256
          %328 = vsyncadd %s321, %s327
          %s329 = smul.addr %s325, 2
          %s330 = sadd.s32 %s36, %s329
          %s331 = smul.addr %s34, 4
          %s332 = sadd.s32 %s330, %s331
          %s333 = smul.addr %s332, 128
          %s334 = scalar_lea.hbm %s0, %s333
          %s335 = sshll.u32 %s324, 4
          %s336 = int_to_ptr.vmem [resolvable:$true] %s335
          %341 = dma.hbm_to_vmem [thread:$0]  %s334, 256, %s336, %s321, 256, 128, 8
        $region28: #{tpu_custom_call.1} parent=23 // pred_fallthru
          _
        // Predicated region
        $region29: #{tpu_custom_call.1} parent=23 // pred_check
          %p342 = pneg %p96
        $region30: #{tpu_custom_call.1} parent=23 // pred_check_branch
          %344 = sbr.rel (%p342) target = $region32
        $region31: #{tpu_custom_call.1} parent=23 // pred_region
          %p345 = scmp.lt.s32.totalorder %s36, 1
          %s346 = scalar_select %p345, %s36, 1
          %s347 = scalar_lea.vmem %s1, %s346
        $region32: #{tpu_custom_call.1} parent=23 // pred_fallthru
          _
        // Predicated region
        $region33: #{tpu_custom_call.1} parent=23 // pred_check
          %p348 = pneg %p122
        $region34: #{tpu_custom_call.1} parent=23 // pred_check_branch
          %350 = sbr.rel (%p348) target = $region36
        $region35: #{tpu_custom_call.1} parent=23 // pred_region
          %s351 = sand.u32 %s27, 1
          %s352 = scalar_lea.sflag [#allocation8], %s351
          %s353 = sand.u32 %s112, 1
          %s354 = smul.addr %s353, 384
          %s355 = scalar_lea.vmem [#allocation7], %s354
          %s356 = smul.u32 16, %s36
          %s358 = ssub.s32 6144, 6144
          %359 = vsyncadd %s352, %s358
          %s360 = smul.addr %s356, 6
          %s361 = smul.addr %s360, 64
          %s362 = scalar_lea.hbm %s2, %s361
          %s363 = sshll.u32 %s355, 4
          %s364 = int_to_ptr.vmem [resolvable:$true] %s363
          %369 = dma.hbm_to_vmem [thread:$0]  %s362, 6144, %s364, %s352, 384, 384, 24
        $region36: #{tpu_custom_call.1} parent=23 // pred_fallthru
          _
      $region24: #{tpu_custom_call.1} parent=5 // pred_fallthru
        _
      %p370 = scmp.le.s32.totalorder 1, %s27
      %p371 = scmp.lt.s32.totalorder %s27, 5
      %p372 = pnand %p370, %p371
      %p373 = pneg %p372
      // Predicated region
      $region37: #{tpu_custom_call.1} parent=5 // pred_check
        _
      $region38: #{tpu_custom_call.1} parent=5 // pred_check_branch
        %375 = sbr.rel (%p372) target = $region40
      $region39: #{tpu_custom_call.1} parent=5 // pred_region
        %s376 = ssub.s32 %s27, 1
        %s377 = sand.u32 %s63, 1
        %s378 = scalar_lea.sflag [#allocation5], %s377
        %s379 = sand.u32 %s63, 1
        %s380 = smul.addr %s379, 16
        %s381 = scalar_lea.vmem [#allocation4], %s380
        // Predicated region
        $region41: #{tpu_custom_call.1} parent=39 // pred_check
          %p382 = pneg %p76
        $region42: #{tpu_custom_call.1} parent=39 // pred_check_branch
          %384 = sbr.rel (%p382) target = $region44
        $region43: #{tpu_custom_call.1} parent=39 // pred_region
          %385 = dma.done %s378, 256
        $region44: #{tpu_custom_call.1} parent=39 // pred_fallthru
          _
        %s386 = sand.u32 %s32, 1
        %s387 = scalar_lea.sflag [#allocation8], %s386
        %s388 = sand.u32 %s115, 1
        %s389 = smul.addr %s388, 384
        %s390 = scalar_lea.vmem [#allocation7], %s389
        // Predicated region
        $region45: #{tpu_custom_call.1} parent=39 // pred_check
          %p391 = pneg %p128
        $region46: #{tpu_custom_call.1} parent=39 // pred_check_branch
          %393 = sbr.rel (%p391) target = $region48
        $region47: #{tpu_custom_call.1} parent=39 // pred_region
          %394 = dma.done %s387, 6144
        $region48: #{tpu_custom_call.1} parent=39 // pred_fallthru
          _
        // Predicated region
        $region49: #{tpu_custom_call.1} parent=39 // pred_check
          %p395 = pneg %p154
        $region50: #{tpu_custom_call.1} parent=39 // pred_check_branch
          %397 = sbr.rel (%p395) target = $region52
        $region51: #{tpu_custom_call.1} parent=39 // pred_region
          %398 = dma.done [#allocation8], 512
        $region52: #{tpu_custom_call.1} parent=39 // pred_fallthru
          _
        // Predicated region
        $region53: #{tpu_custom_call.1} parent=39 // pred_check
          %p399 = pneg %p180
        $region54: #{tpu_custom_call.1} parent=39 // pred_check_branch
          %401 = sbr.rel (%p399) target = $region56
        $region55: #{tpu_custom_call.1} parent=39 // pred_region
          %402 = dma.done [#allocation11], 512
        $region56: #{tpu_custom_call.1} parent=39 // pred_fallthru
          _
        %s403 = sand.u32 %s63, 1
        %s404 = scalar_lea.sflag [#allocation5], %s403
        %s405 = sand.u32 %s63, 1
        %s406 = smul.addr %s405, 16
        %s407 = scalar_lea.vmem [#allocation4], %s406
        %p408 = pneg %p76
        %p409 = pneg %p73
        %p410 = scmp.lt.s32.totalorder %s39, 1
        %s411 = scalar_select %p410, %s39, 1
        %s412 = scalar_lea.vmem %s1, %s411
        %p413 = pneg %p102
        %p414 = pneg %p99
        %s415 = sand.u32 %s32, 1
        %s416 = scalar_lea.sflag [#allocation8], %s415
        %s417 = sand.u32 %s115, 1
        %s418 = smul.addr %s417, 384
        %s419 = scalar_lea.vmem [#allocation7], %s418
        %p420 = pneg %p128
        %p421 = pneg %p125
        %p422 = pneg %p154
        %p423 = pneg %p151
        %p424 = pneg %p180
        %p425 = pneg %p177
        %p426 = pneg %p208
        %p427 = pneg %p205
        %s428 = sand.u32 %s195, 1
        %s429 = scalar_lea.sflag [#allocation6], %s428
        %s430 = sand.u32 %s195, 1
        %s431 = smul.addr %s430, 16
        %s432 = scalar_lea.vmem [#allocation12], %s431
        %p433 = pneg %p236
        %p434 = pneg %p233
        %s435 = sand.u32 %s32, 1
        %s436 = scalar_lea.sflag [#allocation14], %s435
        %s437 = sand.u32 %s223, 1
        %s438 = smul.addr %s437, 32
        %s439 = scalar_lea.vmem [#allocation13], %s438
        %p440 = pneg %p264
        %p441 = pneg %p261
        %s442 = sand.u32 %s32, 1
        %s443 = scalar_lea.sflag [#allocation14], %s442
        %s444 = sand.u32 %s251, 1
        %s445 = smul.addr %s444, 32
        %s446 = scalar_lea.vmem [#allocation15], %s445
        %s447 = smul.u32 2, %s38
        %p448 = scmp.lt.s32.totalorder %s39, 1
        %s449 = scalar_select %p448, %s39, 1
        %s450 = scalar_lea.vmem %s1, %s449
        %s451 = smul.u32 16, %s39
        %s452 = smul.u32 2, %s38
        %s453 = smul.u32 2, %s38
        %s454 = smul.u32 2, %s38
        %s455 = smul.u32 2, %s38
        %s456 = smul.u32 2, %s38
        %p458 = scmp.eq.s32.totalorder %s39, 0
        // Predicated region
        $region57: #{tpu_custom_call.1} parent=39 // pred_check
          %p459 = pneg %p458
        $region58: #{tpu_custom_call.1} parent=39 // pred_check_branch
          %461 = sbr.rel (%p459) target = $region60
        $region59: #{tpu_custom_call.1} parent=39 // pred_region
          %462 = vst [vmem:[#allocation2] sm:$0xff] 0.0
          %463 = vst [vmem:[#allocation2 + $0x8] sm:$0xff] 0.0
          %464 = vst [vmem:[#allocation2 + $0x10] sm:$0xff] 0.0
          %465 = vst [vmem:[#allocation2 + $0x18] sm:$0xff] 0.0
          %466 = vst [vmem:[#allocation2 + $0x20] sm:$0xff] 0.0
          %467 = vst [vmem:[#allocation2 + $0x28] sm:$0xff] 0.0
          %468 = vst [vmem:[#allocation2 + $0x30] sm:$0xff] 0.0
          %469 = vst [vmem:[#allocation2 + $0x38] sm:$0xff] 0.0
          %470 = vst [vmem:[#allocation2 + $0x40] sm:$0xff] 0.0
          %471 = vst [vmem:[#allocation2 + $0x48] sm:$0xff] 0.0
          %472 = vst [vmem:[#allocation2 + $0x50] sm:$0xff] 0.0
          %473 = vst [vmem:[#allocation2 + $0x58] sm:$0xff] 0.0
          %vm474 = vcmask 7168
          %475 = vst.msk [vmem:[#allocation3] sm:$0xff] %vm474, 0.0
          %476 = vst.msk [vmem:[#allocation3 + $0x8] sm:$0xff] %vm474, 0.0
        $region60: #{tpu_custom_call.1} parent=39 // pred_fallthru
          _
        %v477 = vld [vmem:[%s381] sm:$0xff]
        %v478 = vld [vmem:[%s381 + $0x8] sm:$0xff]
        %v479 = vld [vmem:[#allocation3] sm:$0xff]
        %v480 = vld [vmem:[#allocation3 + $0x8] sm:$0xff]
        %v481 = vmul.f32 %v477, %v477
        %v482 = vmul.f32 %v478, %v478
        %483 = vadd.xlane.f32.xlu0 %v481
        %v484 = vpop.xlane.xlu0 %483
        %485 = vadd.xlane.f32.xlu0 %v482
        %v486 = vpop.xlane.xlu0 %485
        %v487 = vadd.f32 %v479, %v484
        %v488 = vadd.f32 %v480, %v486
        %vm489 = vcmask 7168
        %490 = vst.msk [vmem:[#allocation3] sm:$0xff] %vm489, %v487
        %491 = vst.msk [vmem:[#allocation3 + $0x8] sm:$0xff] %vm489, %v488
        %v492 = vld [vmem:[%s450] sm:$0x1]
        %v494 = vlaneseq
        %v495 = vshrl.u32 %v494, 7
        %v496 = vsub.s32 0, %v495
        %v497 = vrot.slane %v492, %v496
        %v499 = vmul.f32 %v477, %v497
        %v500 = vmul.f32 %v478, %v497
        %v501 = vpack.c.bf16 %v500, %v499
        %v502 = vld [vmem:[#allocation2] sm:$0xff]
        %v503 = vld [vmem:[#allocation2 + $0x8] sm:$0xff]
        %v504 = vld [vmem:[#allocation2 + $0x10] sm:$0xff]
        %v505 = vld [vmem:[#allocation2 + $0x18] sm:$0xff]
        %v506 = vld [vmem:[#allocation2 + $0x20] sm:$0xff]
        %v507 = vld [vmem:[#allocation2 + $0x28] sm:$0xff]
        %v508 = vld [vmem:[#allocation2 + $0x30] sm:$0xff]
        %v509 = vld [vmem:[#allocation2 + $0x38] sm:$0xff]
        %v510 = vld [vmem:[#allocation2 + $0x40] sm:$0xff]
        %v511 = vld [vmem:[#allocation2 + $0x48] sm:$0xff]
        %v512 = vld [vmem:[#allocation2 + $0x50] sm:$0xff]
        %v513 = vld [vmem:[#allocation2 + $0x58] sm:$0xff]
        %v514 = vld [vmem:[%s390] sm:$0xff]
        %v515 = vld [vmem:[%s390 + $0x8] sm:$0xff]
        %v516 = vld [vmem:[%s390 + $0x10] sm:$0xff]
        %v517 = vld [vmem:[%s390 + $0x18] sm:$0xff]
        %v518 = vld [vmem:[%s390 + $0x20] sm:$0xff]
        %v519 = vld [vmem:[%s390 + $0x28] sm:$0xff]
        %v520 = vld [vmem:[%s390 + $0x30] sm:$0xff]
        %v521 = vld [vmem:[%s390 + $0x38] sm:$0xff]
        %v522 = vld [vmem:[%s390 + $0x40] sm:$0xff]
        %v523 = vld [vmem:[%s390 + $0x48] sm:$0xff]
        %v524 = vld [vmem:[%s390 + $0x50] sm:$0xff]
        %v525 = vld [vmem:[%s390 + $0x58] sm:$0xff]
        %v526 = vld [vmem:[%s390 + $0x60] sm:$0xff]
        %v527 = vld [vmem:[%s390 + $0x68] sm:$0xff]
        %v528 = vld [vmem:[%s390 + $0x70] sm:$0xff]
        %v529 = vld [vmem:[%s390 + $0x78] sm:$0xff]
        %v530 = vld [vmem:[%s390 + $0x80] sm:$0xff]
        %v531 = vld [vmem:[%s390 + $0x88] sm:$0xff]
        %v532 = vld [vmem:[%s390 + $0x90] sm:$0xff]
        %v533 = vld [vmem:[%s390 + $0x98] sm:$0xff]
        %v534 = vld [vmem:[%s390 + $0xa0] sm:$0xff]
        %v535 = vld [vmem:[%s390 + $0xa8] sm:$0xff]
        %v536 = vld [vmem:[%s390 + $0xb0] sm:$0xff]
        %v537 = vld [vmem:[%s390 + $0xb8] sm:$0xff]
        %v538 = vld [vmem:[%s390 + $0xc0] sm:$0xff]
        %v539 = vld [vmem:[%s390 + $0xc8] sm:$0xff]
        %v540 = vld [vmem:[%s390 + $0xd0] sm:$0xff]
        %v541 = vld [vmem:[%s390 + $0xd8] sm:$0xff]
        %v542 = vld [vmem:[%s390 + $0xe0] sm:$0xff]
        %v543 = vld [vmem:[%s390 + $0xe8] sm:$0xff]
        %v544 = vld [vmem:[%s390 + $0xf0] sm:$0xff]
        %v545 = vld [vmem:[%s390 + $0xf8] sm:$0xff]
        %v546 = vld [vmem:[%s390 + $0x100] sm:$0xff]
        %v547 = vld [vmem:[%s390 + $0x108] sm:$0xff]
        %v548 = vld [vmem:[%s390 + $0x110] sm:$0xff]
        %v549 = vld [vmem:[%s390 + $0x118] sm:$0xff]
        %v550 = vld [vmem:[%s390 + $0x120] sm:$0xff]
        %v551 = vld [vmem:[%s390 + $0x128] sm:$0xff]
        %v552 = vld [vmem:[%s390 + $0x130] sm:$0xff]
        %v553 = vld [vmem:[%s390 + $0x138] sm:$0xff]
        %v554 = vld [vmem:[%s390 + $0x140] sm:$0xff]
        %v555 = vld [vmem:[%s390 + $0x148] sm:$0xff]
        %v556 = vld [vmem:[%s390 + $0x150] sm:$0xff]
        %v557 = vld [vmem:[%s390 + $0x158] sm:$0xff]
        %v558 = vld [vmem:[%s390 + $0x160] sm:$0xff]
        %v559 = vld [vmem:[%s390 + $0x168] sm:$0xff]
        %v560 = vld [vmem:[%s390 + $0x170] sm:$0xff]
        %v561 = vld [vmem:[%s390 + $0x178] sm:$0xff]
        %v610 = vunpack.c.l.b16 %v514
        %v611 = vunpack.c.h.b16 %v514
        %v612 = vunpack.c.l.b16 %v515
        %v613 = vunpack.c.h.b16 %v515
        %v614 = vunpack.c.l.b16 %v516
        %v615 = vunpack.c.h.b16 %v516
        %v616 = vunpack.c.l.b16 %v517
        %v617 = vunpack.c.h.b16 %v517
        %v618 = vunpack.c.l.b16 %v518
        %v619 = vunpack.c.h.b16 %v518
        %v620 = vunpack.c.l.b16 %v519
        %v621 = vunpack.c.h.b16 %v519
        %v622 = vunpack.c.l.b16 %v520
        %v623 = vunpack.c.h.b16 %v520
        %v624 = vunpack.c.l.b16 %v521
        %v625 = vunpack.c.h.b16 %v521
        %v626 = vunpack.c.l.b16 %v522
        %v627 = vunpack.c.h.b16 %v522
        %v628 = vunpack.c.l.b16 %v523
        %v629 = vunpack.c.h.b16 %v523
        %v630 = vunpack.c.l.b16 %v524
        %v631 = vunpack.c.h.b16 %v524
        %v632 = vunpack.c.l.b16 %v525
        %v633 = vunpack.c.h.b16 %v525
        %v634 = vunpack.c.l.b16 %v526
        %v635 = vunpack.c.h.b16 %v526
        %v636 = vunpack.c.l.b16 %v527
        %v637 = vunpack.c.h.b16 %v527
        %v638 = vunpack.c.l.b16 %v528
        %v639 = vunpack.c.h.b16 %v528
        %v640 = vunpack.c.l.b16 %v529
        %v641 = vunpack.c.h.b16 %v529
        %v642 = vunpack.c.l.b16 %v530
        %v643 = vunpack.c.h.b16 %v530
        %v644 = vunpack.c.l.b16 %v531
        %v645 = vunpack.c.h.b16 %v531
        %v646 = vunpack.c.l.b16 %v532
        %v647 = vunpack.c.h.b16 %v532
        %v648 = vunpack.c.l.b16 %v533
        %v649 = vunpack.c.h.b16 %v533
        %v650 = vunpack.c.l.b16 %v534
        %v651 = vunpack.c.h.b16 %v534
        %v652 = vunpack.c.l.b16 %v535
        %v653 = vunpack.c.h.b16 %v535
        %v654 = vunpack.c.l.b16 %v536
        %v655 = vunpack.c.h.b16 %v536
        %v656 = vunpack.c.l.b16 %v537
        %v657 = vunpack.c.h.b16 %v537
        %v658 = vunpack.c.l.b16 %v538
        %v659 = vunpack.c.h.b16 %v538
        %v660 = vunpack.c.l.b16 %v539
        %v661 = vunpack.c.h.b16 %v539
        %v662 = vunpack.c.l.b16 %v540
        %v663 = vunpack.c.h.b16 %v540
        %v664 = vunpack.c.l.b16 %v541
        %v665 = vunpack.c.h.b16 %v541
        %v666 = vunpack.c.l.b16 %v542
        %v667 = vunpack.c.h.b16 %v542
        %v668 = vunpack.c.l.b16 %v543
        %v669 = vunpack.c.h.b16 %v543
        %v670 = vunpack.c.l.b16 %v544
        %v671 = vunpack.c.h.b16 %v544
        %v672 = vunpack.c.l.b16 %v545
        %v673 = vunpack.c.h.b16 %v545
        %v674 = vunpack.c.l.b16 %v546
        %v675 = vunpack.c.h.b16 %v546
        %v676 = vunpack.c.l.b16 %v547
        %v677 = vunpack.c.h.b16 %v547
        %v678 = vunpack.c.l.b16 %v548
        %v679 = vunpack.c.h.b16 %v548
        %v680 = vunpack.c.l.b16 %v549
        %v681 = vunpack.c.h.b16 %v549
        %v682 = vunpack.c.l.b16 %v550
        %v683 = vunpack.c.h.b16 %v550
        %v684 = vunpack.c.l.b16 %v551
        %v685 = vunpack.c.h.b16 %v551
        %v686 = vunpack.c.l.b16 %v552
        %v687 = vunpack.c.h.b16 %v552
        %v688 = vunpack.c.l.b16 %v553
        %v689 = vunpack.c.h.b16 %v553
        %v690 = vunpack.c.l.b16 %v554
        %v691 = vunpack.c.h.b16 %v554
        %v692 = vunpack.c.l.b16 %v555
        %v693 = vunpack.c.h.b16 %v555
        %v694 = vunpack.c.l.b16 %v556
        %v695 = vunpack.c.h.b16 %v556
        %v696 = vunpack.c.l.b16 %v557
        %v697 = vunpack.c.h.b16 %v557
        %v698 = vunpack.c.l.b16 %v558
        %v699 = vunpack.c.h.b16 %v558
        %v700 = vunpack.c.l.b16 %v559
        %v701 = vunpack.c.h.b16 %v559
        %v702 = vunpack.c.l.b16 %v560
        %v703 = vunpack.c.h.b16 %v560
        %v704 = vunpack.c.l.b16 %v561
        %v705 = vunpack.c.h.b16 %v561
        %v706 = vpack.c.b16 %v616, %v610
        %v707 = vpack.c.b16 %v617, %v611
        %v708 = vpack.c.b16 %v618, %v612
        %v709 = vpack.c.b16 %v619, %v613
        %v710 = vpack.c.b16 %v620, %v614
        %v711 = vpack.c.b16 %v621, %v615
        %v712 = vpack.c.b16 %v628, %v622
        %v713 = vpack.c.b16 %v629, %v623
        %v714 = vpack.c.b16 %v630, %v624
        %v715 = vpack.c.b16 %v631, %v625
        %v716 = vpack.c.b16 %v632, %v626
        %v717 = vpack.c.b16 %v633, %v627
        %v718 = vpack.c.b16 %v640, %v634
        %v719 = vpack.c.b16 %v641, %v635
        %v720 = vpack.c.b16 %v642, %v636
        %v721 = vpack.c.b16 %v643, %v637
        %v722 = vpack.c.b16 %v644, %v638
        %v723 = vpack.c.b16 %v645, %v639
        %v724 = vpack.c.b16 %v652, %v646
        %v725 = vpack.c.b16 %v653, %v647
        %v726 = vpack.c.b16 %v654, %v648
        %v727 = vpack.c.b16 %v655, %v649
        %v728 = vpack.c.b16 %v656, %v650
        %v729 = vpack.c.b16 %v657, %v651
        %v730 = vpack.c.b16 %v664, %v658
        %v731 = vpack.c.b16 %v665, %v659
        %v732 = vpack.c.b16 %v666, %v660
        %v733 = vpack.c.b16 %v667, %v661
        %v734 = vpack.c.b16 %v668, %v662
        %v735 = vpack.c.b16 %v669, %v663
        %v736 = vpack.c.b16 %v676, %v670
        %v737 = vpack.c.b16 %v677, %v671
        %v738 = vpack.c.b16 %v678, %v672
        %v739 = vpack.c.b16 %v679, %v673
        %v740 = vpack.c.b16 %v680, %v674
        %v741 = vpack.c.b16 %v681, %v675
        %v742 = vpack.c.b16 %v688, %v682
        %v743 = vpack.c.b16 %v689, %v683
        %v744 = vpack.c.b16 %v690, %v684
        %v745 = vpack.c.b16 %v691, %v685
        %v746 = vpack.c.b16 %v692, %v686
        %v747 = vpack.c.b16 %v693, %v687
        %v748 = vpack.c.b16 %v700, %v694
        %v749 = vpack.c.b16 %v701, %v695
        %v750 = vpack.c.b16 %v702, %v696
        %v751 = vpack.c.b16 %v703, %v697
        %v752 = vpack.c.b16 %v704, %v698
        %v753 = vpack.c.b16 %v705, %v699
        %802 = vmatprep.subr.bf16.mxu0 %v707
        %803 = vmatpush1.bf16.msra.mxu0 %v706
        %804 = vmatprep.subr.bf16.mxu0 %v713
        %805 = vmatpush1.bf16.msra.mxu0 %v712
        %806 = vmatprep.subr.bf16.mxu0 %v719
        %807 = vmatpush1.bf16.msra.mxu0 %v718
        %808 = vmatprep.subr.bf16.mxu0 %v725
        %809 = vmatpush1.bf16.msra.mxu0 %v724
        %810 = vmatprep.subr.bf16.mxu0 %v731
        %811 = vmatpush1.bf16.msra.mxu0 %v730
        %812 = vmatprep.subr.bf16.mxu0 %v737
        %813 = vmatpush1.bf16.msra.mxu0 %v736
        %814 = vmatprep.subr.bf16.mxu0 %v743
        %815 = vmatpush1.bf16.msra.mxu0 %v742
        %816 = vmatprep.subr.bf16.mxu0 %v749
        %817 = vmatpush1.bf16.msra.mxu0 %v748
        %818 = vmatprep.subr.bf16.mxu0 0
        %819 = vmatpush1.bf16.msra.mxu0 0
        %820 = vmatprep.subr.bf16.mxu0 0
        %821 = vmatpush1.bf16.msra.mxu0 0
        %822 = vmatprep.subr.bf16.mxu0 0
        %823 = vmatpush1.bf16.msra.mxu0 0
        %824 = vmatprep.subr.bf16.mxu0 0
        %825 = vmatpush1.bf16.msra.mxu0 0
        %826 = vmatprep.subr.bf16.mxu0 0
        %827 = vmatpush1.bf16.msra.mxu0 0
        %828 = vmatprep.subr.bf16.mxu0 0
        %829 = vmatpush1.bf16.msra.mxu0 0
        %830 = vmatprep.subr.bf16.mxu0 0
        %831 = vmatpush1.bf16.msra.mxu0 0
        %832 = vmatprep.subr.bf16.mxu0 0
        %833 = vmatpush1.bf16.msra.mxu0 0
        %834 = vmatprep.mubr.bf16.mxu0 0
        %835 = vmatmul.mubr.bf16.gmra.mrb[0].mxu0 %v501
        %v836 = vpop.f32.mrb[0].mxu0
        %v837 = vadd.f32 0.0, %v836
        %v838 = vpop.f32.mrb[0].mxu0
        %v839 = vadd.f32 0.0, %v838
        %v840 = vpop.f32.mrb[0].mxu0
        %v841 = vadd.f32 0.0, %v840
        %v842 = vpop.f32.mrb[0].mxu0
        %v843 = vadd.f32 0.0, %v842
        %844 = vdwg.mxu0
        %845 = vmatprep.subr.bf16.mxu0 %v709
        %846 = vmatpush1.bf16.msra.mxu0 %v708
        %847 = vmatprep.subr.bf16.mxu0 %v715
        %848 = vmatpush1.bf16.msra.mxu0 %v714
        %849 = vmatprep.subr.bf16.mxu0 %v721
        %850 = vmatpush1.bf16.msra.mxu0 %v720
        %851 = vmatprep.subr.bf16.mxu0 %v727
        %852 = vmatpush1.bf16.msra.mxu0 %v726
        %853 = vmatprep.subr.bf16.mxu0 %v733
        %854 = vmatpush1.bf16.msra.mxu0 %v732
        %855 = vmatprep.subr.bf16.mxu0 %v739
        %856 = vmatpush1.bf16.msra.mxu0 %v738
        %857 = vmatprep.subr.bf16.mxu0 %v745
        %858 = vmatpush1.bf16.msra.mxu0 %v744
        %859 = vmatprep.subr.bf16.mxu0 %v751
        %860 = vmatpush1.bf16.msra.mxu0 %v750
        %861 = vmatprep.subr.bf16.mxu0 0
        %862 = vmatpush1.bf16.msra.mxu0 0
        %863 = vmatprep.subr.bf16.mxu0 0
        %864 = vmatpush1.bf16.msra.mxu0 0
        %865 = vmatprep.subr.bf16.mxu0 0
        %866 = vmatpush1.bf16.msra.mxu0 0
        %867 = vmatprep.subr.bf16.mxu0 0
        %868 = vmatpush1.bf16.msra.mxu0 0
        %869 = vmatprep.subr.bf16.mxu0 0
        %870 = vmatpush1.bf16.msra.mxu0 0
        %871 = vmatprep.subr.bf16.mxu0 0
        %872 = vmatpush1.bf16.msra.mxu0 0
        %873 = vmatprep.subr.bf16.mxu0 0
        %874 = vmatpush1.bf16.msra.mxu0 0
        %875 = vmatprep.subr.bf16.mxu0 0
        %876 = vmatpush1.bf16.msra.mxu0 0
        %877 = vmatprep.mubr.bf16.mxu0 0
        %878 = vmatmul.mubr.bf16.gmra.mrb[0].mxu0 %v501
        %v879 = vpop.f32.mrb[0].mxu0
        %v880 = vadd.f32 0.0, %v879
        %v881 = vpop.f32.mrb[0].mxu0
        %v882 = vadd.f32 0.0, %v881
        %v883 = vpop.f32.mrb[0].mxu0
        %v884 = vadd.f32 0.0, %v883
        %v885 = vpop.f32.mrb[0].mxu0
        %v886 = vadd.f32 0.0, %v885
        %887 = vdwg.mxu0
        %888 = vmatprep.subr.bf16.mxu0 %v711
        %889 = vmatpush1.bf16.msra.mxu0 %v710
        %890 = vmatprep.subr.bf16.mxu0 %v717
        %891 = vmatpush1.bf16.msra.mxu0 %v716
        %892 = vmatprep.subr.bf16.mxu0 %v723
        %893 = vmatpush1.bf16.msra.mxu0 %v722
        %894 = vmatprep.subr.bf16.mxu0 %v729
        %895 = vmatpush1.bf16.msra.mxu0 %v728
        %896 = vmatprep.subr.bf16.mxu0 %v735
        %897 = vmatpush1.bf16.msra.mxu0 %v734
        %898 = vmatprep.subr.bf16.mxu0 %v741
        %899 = vmatpush1.bf16.msra.mxu0 %v740
        %900 = vmatprep.subr.bf16.mxu0 %v747
        %901 = vmatpush1.bf16.msra.mxu0 %v746
        %902 = vmatprep.subr.bf16.mxu0 %v753
        %903 = vmatpush1.bf16.msra.mxu0 %v752
        %904 = vmatprep.subr.bf16.mxu0 0
        %905 = vmatpush1.bf16.msra.mxu0 0
        %906 = vmatprep.subr.bf16.mxu0 0
        %907 = vmatpush1.bf16.msra.mxu0 0
        %908 = vmatprep.subr.bf16.mxu0 0
        %909 = vmatpush1.bf16.msra.mxu0 0
        %910 = vmatprep.subr.bf16.mxu0 0
        %911 = vmatpush1.bf16.msra.mxu0 0
        %912 = vmatprep.subr.bf16.mxu0 0
        %913 = vmatpush1.bf16.msra.mxu0 0
        %914 = vmatprep.subr.bf16.mxu0 0
        %915 = vmatpush1.bf16.msra.mxu0 0
        %916 = vmatprep.subr.bf16.mxu0 0
        %917 = vmatpush1.bf16.msra.mxu0 0
        %918 = vmatprep.subr.bf16.mxu0 0
        %919 = vmatpush1.bf16.msra.mxu0 0
        %920 = vmatprep.mubr.bf16.mxu0 0
        %921 = vmatmul.mubr.bf16.gmra.mrb[0].mxu0 %v501
        %v922 = vpop.f32.mrb[0].mxu0
        %v923 = vadd.f32 0.0, %v922
        %v924 = vpop.f32.mrb[0].mxu0
        %v925 = vadd.f32 0.0, %v924
        %v926 = vpop.f32.mrb[0].mxu0
        %v927 = vadd.f32 0.0, %v926
        %v928 = vpop.f32.mrb[0].mxu0
        %v929 = vadd.f32 0.0, %v928
        %930 = vdwg.mxu0
        %v931 = vadd.f32 %v502, %v837
        %v932 = vadd.f32 %v503, %v839
        %v933 = vadd.f32 %v504, %v880
        %v934 = vadd.f32 %v505, %v882
        %v935 = vadd.f32 %v506, %v923
        %v936 = vadd.f32 %v507, %v925
        %v937 = vadd.f32 %v508, %v841
        %v938 = vadd.f32 %v509, %v843
        %v939 = vadd.f32 %v510, %v884
        %v940 = vadd.f32 %v511, %v886
        %v941 = vadd.f32 %v512, %v927
        %v942 = vadd.f32 %v513, %v929
        %943 = vst [vmem:[#allocation2] sm:$0xff] %v931
        %944 = vst [vmem:[#allocation2 + $0x8] sm:$0xff] %v932
        %945 = vst [vmem:[#allocation2 + $0x10] sm:$0xff] %v933
        %946 = vst [vmem:[#allocation2 + $0x18] sm:$0xff] %v934
        %947 = vst [vmem:[#allocation2 + $0x20] sm:$0xff] %v935
        %948 = vst [vmem:[#allocation2 + $0x28] sm:$0xff] %v936
        %949 = vst [vmem:[#allocation2 + $0x30] sm:$0xff] %v937
        %950 = vst [vmem:[#allocation2 + $0x38] sm:$0xff] %v938
        %951 = vst [vmem:[#allocation2 + $0x40] sm:$0xff] %v939
        %952 = vst [vmem:[#allocation2 + $0x48] sm:$0xff] %v940
        %953 = vst [vmem:[#allocation2 + $0x50] sm:$0xff] %v941
        %954 = vst [vmem:[#allocation2 + $0x58] sm:$0xff] %v942
        %p955 = scmp.eq.s32.totalorder %s39, 1
        // Predicated region
        $region61: #{tpu_custom_call.1} parent=39 // pred_check
          %p956 = pneg %p955
        $region62: #{tpu_custom_call.1} parent=39 // pred_check_branch
          %958 = sbr.rel (%p956) target = $region64
        $region63: #{tpu_custom_call.1} parent=39 // pred_region
          %v959 = vld [vmem:[#allocation3] sm:$0xff]
          %v960 = vld [vmem:[#allocation3 + $0x8] sm:$0xff]
          %v961 = vmul.f32 %v959, 0.00390625
          %v962 = vmul.f32 %v960, 0.00390625
          %v963 = vadd.f32 %v961, 1e-05
          %v964 = vadd.f32 %v962, 1e-05
          %v965 = vrsqrt.pop %v963
          %v966 = vrsqrt.pop %v964
          %v967 = vld [vmem:[#allocation2] sm:$0xff]
          %v968 = vld [vmem:[#allocation2 + $0x8] sm:$0xff]
          %v969 = vld [vmem:[#allocation2 + $0x10] sm:$0xff]
          %v970 = vld [vmem:[#allocation2 + $0x18] sm:$0xff]
          %v971 = vld [vmem:[#allocation2 + $0x20] sm:$0xff]
          %v972 = vld [vmem:[#allocation2 + $0x28] sm:$0xff]
          %v973 = vld [vmem:[#allocation2 + $0x30] sm:$0xff]
          %v974 = vld [vmem:[#allocation2 + $0x38] sm:$0xff]
          %v975 = vld [vmem:[#allocation2 + $0x40] sm:$0xff]
          %v976 = vld [vmem:[#allocation2 + $0x48] sm:$0xff]
          %v977 = vld [vmem:[#allocation2 + $0x50] sm:$0xff]
          %v978 = vld [vmem:[#allocation2 + $0x58] sm:$0xff]
          %980 = vset.pattern.permute.xlu0 0
          %981 = vperm.xlu0 %980, %v965
          %v982 = vpop.permute.xlu0 %981
          %985 = vset.pattern.permute.xlu0 0
          %986 = vperm.xlu0 %985, %v966
          %v987 = vpop.permute.xlu0 %986
          %v989 = vmul.f32 %v967, %v982
          %v990 = vmul.f32 %v968, %v982
          %v991 = vmul.f32 %v969, %v982
          %v992 = vmul.f32 %v970, %v982
          %v993 = vmul.f32 %v971, %v982
          %v994 = vmul.f32 %v972, %v982
          %v995 = vmul.f32 %v973, %v987
          %v996 = vmul.f32 %v974, %v987
          %v997 = vmul.f32 %v975, %v987
          %v998 = vmul.f32 %v976, %v987
          %v999 = vmul.f32 %v977, %v987
          %v1000 = vmul.f32 %v978, %v987
          %v1001 = vlaneseq
          %v1002 = vand.u32 %v1001, 127
          %v1003 = vadd.s32 %v1002, 128
          %v1004 = vadd.s32 %v1002, 256
          %v1005 = vadd.s32 %v1002, 384
          %vm1006 = vcmp.lt.s32.totalorder %v1002, 0
          %v1007 = vsub.s32 0, %v1002
          %v1008 = vsel %vm1006, %v1007, %v1002
          %v1009 = vshrl.u32 %v1008, 1
          %v1010 = vand.u32 %v1008, 1
          %v1011 = vsub.s32 0, %v1010
          %v1012 = vsel %vm1006, %v1011, %v1010
          %vm1013 = vcmp.lt.s32.totalorder %v1003, 0
          %v1014 = vsub.s32 0, %v1003
          %v1015 = vsel %vm1013, %v1014, %v1003
          %v1016 = vshrl.u32 %v1015, 1
          %v1017 = vand.u32 %v1015, 1
          %v1018 = vsub.s32 0, %v1017
          %v1019 = vsel %vm1013, %v1018, %v1017
          %vm1020 = vcmp.lt.s32.totalorder %v1004, 0
          %v1021 = vsub.s32 0, %v1004
          %v1022 = vsel %vm1020, %v1021, %v1004
          %v1023 = vshrl.u32 %v1022, 1
          %v1024 = vand.u32 %v1022, 1
          %v1025 = vsub.s32 0, %v1024
          %v1026 = vsel %vm1020, %v1025, %v1024
          %vm1027 = vcmp.lt.s32.totalorder %v1005, 0
          %v1028 = vsub.s32 0, %v1005
          %v1029 = vsel %vm1027, %v1028, %v1005
          %v1030 = vshrl.u32 %v1029, 1
          %v1031 = vand.u32 %v1029, 1
          %v1032 = vsub.s32 0, %v1031
          %v1033 = vsel %vm1027, %v1032, %v1031
          %vm1034 = vcmp.ne.s32.totalorder %v1012, 0
          %vm1035 = vcmp.ne.s32.totalorder %v1019, 0
          %vm1036 = vcmp.ne.s32.totalorder %v1026, 0
          %vm1037 = vcmp.ne.s32.totalorder %v1033, 0
          %vm1038 = vcmp.lt.s32.totalorder %v1012, 0
          %vm1039 = vcmp.lt.s32.totalorder %v1019, 0
          %vm1040 = vcmp.lt.s32.totalorder %v1026, 0
          %vm1041 = vcmp.lt.s32.totalorder %v1033, 0
          %vm1042 = vmand %vm1038, %vm1034
          %vm1043 = vmand %vm1039, %vm1035
          %vm1044 = vmand %vm1040, %vm1036
          %vm1045 = vmand %vm1041, %vm1037
          %v1046 = vadd.s32 %v1012, 2
          %v1047 = vadd.s32 %v1019, 2
          %v1048 = vadd.s32 %v1026, 2
          %v1049 = vadd.s32 %v1033, 2
          %v1050 = vsel %vm1042, %v1046, %v1012
          %v1051 = vsel %vm1043, %v1047, %v1019
          %v1052 = vsel %vm1044, %v1048, %v1026
          %v1053 = vsel %vm1045, %v1049, %v1033
          %vm1054 = vcmp.eq.s32.totalorder %v1050, 0
          %vm1055 = vcmp.eq.s32.totalorder %v1051, 0
          %vm1056 = vcmp.eq.s32.totalorder %v1052, 0
          %vm1057 = vcmp.eq.s32.totalorder %v1053, 0
          %1058 = vrot.lane.b32.xlu0 %v989, 127
          %v1059 = vpop.permute.xlu0 %1058
          %1060 = vrot.lane.b32.xlu0 %v995, 127
          %v1061 = vpop.permute.xlu0 %1060
          %1062 = vrot.lane.b32.xlu0 %v990, 127
          %v1063 = vpop.permute.xlu0 %1062
          %1064 = vrot.lane.b32.xlu0 %v996, 127
          %v1065 = vpop.permute.xlu0 %1064
          %1066 = vrot.lane.b32.xlu0 %v991, 127
          %v1067 = vpop.permute.xlu0 %1066
          %1068 = vrot.lane.b32.xlu0 %v997, 127
          %v1069 = vpop.permute.xlu0 %1068
          %1070 = vrot.lane.b32.xlu0 %v992, 127
          %v1071 = vpop.permute.xlu0 %1070
          %1072 = vrot.lane.b32.xlu0 %v998, 127
          %v1073 = vpop.permute.xlu0 %1072
          %vm1074 = vcmp.lt.s32.totalorder %v1002, 127
          %v1075 = vsel %vm1074, %v1067, %v1071
          %v1076 = vsel %vm1074, %v1069, %v1073
          %v1077 = vsel %vm1074, %v1063, %v1067
          %v1078 = vsel %vm1074, %v1065, %v1069
          %v1079 = vsel %vm1074, %v1059, %v1063
          %v1080 = vsel %vm1074, %v1061, %v1065
          %v1081 = vsel %vm1074, %v1071, %v1059
          %v1082 = vsel %vm1074, %v1073, %v1061
          %v1083 = vsub.f32 0.0, %v1079
          %v1084 = vsub.f32 0.0, %v1077
          %v1085 = vsub.f32 0.0, %v1075
          %v1086 = vsub.f32 0.0, %v1081
          %v1087 = vsub.f32 0.0, %v1080
          %v1088 = vsub.f32 0.0, %v1078
          %v1089 = vsub.f32 0.0, %v1076
          %v1090 = vsub.f32 0.0, %v1082
          %1091 = vrot.lane.b32.xlu0 %v989, 1
          %v1092 = vpop.permute.xlu0 %1091
          %1093 = vrot.lane.b32.xlu0 %v995, 1
          %v1094 = vpop.permute.xlu0 %1093
          %1095 = vrot.lane.b32.xlu0 %v990, 1
          %v1096 = vpop.permute.xlu0 %1095
          %1097 = vrot.lane.b32.xlu0 %v996, 1
          %v1098 = vpop.permute.xlu0 %1097
          %1099 = vrot.lane.b32.xlu0 %v991, 1
          %v1100 = vpop.permute.xlu0 %1099
          %1101 = vrot.lane.b32.xlu0 %v997, 1
          %v1102 = vpop.permute.xlu0 %1101
          %1103 = vrot.lane.b32.xlu0 %v992, 1
          %v1104 = vpop.permute.xlu0 %1103
          %1105 = vrot.lane.b32.xlu0 %v998, 1
          %v1106 = vpop.permute.xlu0 %1105
          %vm1107 = vcmp.lt.s32.totalorder %v1002, 1
          %v1108 = vsel %vm1107, %v1100, %v1104
          %v1109 = vsel %vm1107, %v1102, %v1106
          %v1110 = vsel %vm1107, %v1096, %v1100
          %v1111 = vsel %vm1107, %v1098, %v1102
          %v1112 = vsel %vm1107, %v1092, %v1096
          %v1113 = vsel %vm1107, %v1094, %v1098
          %v1114 = vsel %vm1107, %v1104, %v1092
          %v1115 = vsel %vm1107, %v1106, %v1094
          %v1116 = vsel %vm1054, %v1083, %v1114
          %v1117 = vsel %vm1055, %v1084, %v1112
          %v1118 = vsel %vm1056, %v1085, %v1110
          %v1119 = vsel %vm1057, %v1086, %v1108
          %v1120 = vsel %vm1054, %v1087, %v1115
          %v1121 = vsel %vm1055, %v1088, %v1113
          %v1122 = vsel %vm1056, %v1089, %v1111
          %v1123 = vsel %vm1057, %v1090, %v1109
          %v1124 = vld [vmem:[#allocation9] sm:$0xff]
          %v1125 = vld [vmem:[#allocation9 + $0x8] sm:$0xff]
          %v1126 = vld [vmem:[#allocation9 + $0x10] sm:$0xff]
          %v1127 = vld [vmem:[#allocation9 + $0x18] sm:$0xff]
          %v1128 = vunpack.c.l.bf16 %v1124
          %v1129 = vunpack.c.h.bf16 %v1124
          %v1130 = vunpack.c.l.bf16 %v1125
          %v1131 = vunpack.c.h.bf16 %v1125
          %v1132 = vunpack.c.l.bf16 %v1126
          %v1133 = vunpack.c.h.bf16 %v1126
          %v1134 = vunpack.c.l.bf16 %v1127
          %v1135 = vunpack.c.h.bf16 %v1127
          %v1136 = vmul.f32 %v989, %v1128
          %v1137 = vmul.f32 %v990, %v1129
          %v1138 = vmul.f32 %v991, %v1130
          %v1139 = vmul.f32 %v992, %v1131
          %v1140 = vmul.f32 %v995, %v1132
          %v1141 = vmul.f32 %v996, %v1133
          %v1142 = vmul.f32 %v997, %v1134
          %v1143 = vmul.f32 %v998, %v1135
          %v1144 = vld [vmem:[#allocation10] sm:$0xff]
          %v1145 = vld [vmem:[#allocation10 + $0x8] sm:$0xff]
          %v1146 = vld [vmem:[#allocation10 + $0x10] sm:$0xff]
          %v1147 = vld [vmem:[#allocation10 + $0x18] sm:$0xff]
          %v1148 = vunpack.c.l.bf16 %v1144
          %v1149 = vunpack.c.h.bf16 %v1144
          %v1150 = vunpack.c.l.bf16 %v1145
          %v1151 = vunpack.c.h.bf16 %v1145
          %v1152 = vunpack.c.l.bf16 %v1146
          %v1153 = vunpack.c.h.bf16 %v1146
          %v1154 = vunpack.c.l.bf16 %v1147
          %v1155 = vunpack.c.h.bf16 %v1147
          %v1156 = vmul.f32 %v1116, %v1148
          %v1157 = vmul.f32 %v1117, %v1149
          %v1158 = vmul.f32 %v1118, %v1150
          %v1159 = vmul.f32 %v1119, %v1151
          %v1160 = vmul.f32 %v1120, %v1152
          %v1161 = vmul.f32 %v1121, %v1153
          %v1162 = vmul.f32 %v1122, %v1154
          %v1163 = vmul.f32 %v1123, %v1155
          %v1164 = vadd.f32 %v1136, %v1156
          %v1165 = vadd.f32 %v1137, %v1157
          %v1166 = vadd.f32 %v1138, %v1158
          %v1167 = vadd.f32 %v1139, %v1159
          %v1168 = vadd.f32 %v1140, %v1160
          %v1169 = vadd.f32 %v1141, %v1161
          %v1170 = vadd.f32 %v1142, %v1162
          %v1171 = vadd.f32 %v1143, %v1163
          %v1172 = vmul.f32 %v1164, 0.088388346
          %v1173 = vmul.f32 %v1165, 0.088388346
          %v1174 = vmul.f32 %v1168, 0.088388346
          %v1175 = vmul.f32 %v1169, 0.088388346
          %v1176 = vpack.c.bf16 %v1174, %v1172
          %v1177 = vpack.c.bf16 %v1175, %v1173
          %v1180 = vunpack.c.l.b16 %v1176
          %v1181 = vunpack.c.l.b16 %v1177
          %v1182 = vunpack.c.h.b16 %v1176
          %v1183 = vunpack.c.h.b16 %v1177
          %v1184 = vpack.c.b16 %v1181, %v1180
          %v1185 = vpack.c.b16 %v1183, %v1182
          %1188 = vst [vmem:[%s432] sm:$0xff] %v1184
          %1189 = vst [vmem:[%s432 + $0x8] sm:$0xff] %v1185
          %1190 = vst [vmem:[%s439] sm:$0xff] %v1166
          %1191 = vst [vmem:[%s439 + $0x8] sm:$0xff] %v1167
          %1192 = vst [vmem:[%s439 + $0x10] sm:$0xff] %v1170
          %1193 = vst [vmem:[%s439 + $0x18] sm:$0xff] %v1171
          %1194 = vst [vmem:[%s446] sm:$0xff] %v993
          %1195 = vst [vmem:[%s446 + $0x8] sm:$0xff] %v994
          %1196 = vst [vmem:[%s446 + $0x10] sm:$0xff] %v999
          %1197 = vst [vmem:[%s446 + $0x18] sm:$0xff] %v1000
        $region64: #{tpu_custom_call.1} parent=39 // pred_fallthru
          _
        %s1198 = sand.u32 %s195, 1
        %s1199 = scalar_lea.sflag [#allocation6], %s1198
        %s1200 = sand.u32 %s195, 1
        %s1201 = smul.addr %s1200, 16
        %s1202 = scalar_lea.vmem [#allocation12], %s1201
        %s1203 = sand.u32 %s32, 1
        %s1204 = scalar_lea.sflag [#allocation14], %s1203
        %s1205 = sand.u32 %s223, 1
        %s1206 = smul.addr %s1205, 32
        %s1207 = scalar_lea.vmem [#allocation13], %s1206
        %s1208 = sand.u32 %s32, 1
        %s1209 = scalar_lea.sflag [#allocation14], %s1208
        %s1210 = sand.u32 %s251, 1
        %s1211 = smul.addr %s1210, 32
        %s1212 = scalar_lea.vmem [#allocation15], %s1211
        // Predicated region
        $region65: #{tpu_custom_call.1} parent=39 // pred_check
          %p1213 = pneg %p205
        $region66: #{tpu_custom_call.1} parent=39 // pred_check_branch
          %1215 = sbr.rel (%p1213) target = $region68
        $region67: #{tpu_custom_call.1} parent=39 // pred_region
          %s1216 = smul.u32 2, %s38
          %s1218 = ssub.s32 256, 256
          %1219 = vsyncadd %s1199, %s1218
          %s1220 = smul.addr %s1216, 2
          %s1221 = smul.addr %s37, 4
          %s1222 = sadd.s32 %s1220, %s1221
          %s1223 = smul.addr %s1222, 64
          %s1224 = scalar_lea.hbm %s5, %s1223
          %s1225 = sshll.u32 %s1202, 4
          %s1226 = int_to_ptr.vmem [resolvable:$true] %s1225
          %1231 = dma.vmem_to_hbm [thread:$0]  %s1226, 256, %s1224, %s1199, 128, 128, 8
        $region68: #{tpu_custom_call.1} parent=39 // pred_fallthru
          _
        // Predicated region
        $region69: #{tpu_custom_call.1} parent=39 // pred_check
          %p1232 = pneg %p233
        $region70: #{tpu_custom_call.1} parent=39 // pred_check_branch
          %1234 = sbr.rel (%p1232) target = $region72
        $region71: #{tpu_custom_call.1} parent=39 // pred_region
          %s1235 = smul.u32 2, %s38
          %s1237 = ssub.s32 512, 512
          %1238 = vsyncadd %s1204, %s1237
          %s1239 = smul.addr %s1235, 2
          %s1240 = smul.addr %s37, 4
          %s1241 = sadd.s32 %s1239, %s1240
          %s1242 = smul.addr %s1241, 128
          %s1243 = scalar_lea.hbm %s6, %s1242
          %s1244 = sshll.u32 %s1207, 4
          %s1245 = int_to_ptr.vmem [resolvable:$true] %s1244
          %1250 = dma.vmem_to_hbm [thread:$0]  %s1245, 512, %s1243, %s1204, 256, 256, 16
        $region72: #{tpu_custom_call.1} parent=39 // pred_fallthru
          _
        // Predicated region
        $region73: #{tpu_custom_call.1} parent=39 // pred_check
          %p1251 = pneg %p261
        $region74: #{tpu_custom_call.1} parent=39 // pred_check_branch
          %1253 = sbr.rel (%p1251) target = $region76
        $region75: #{tpu_custom_call.1} parent=39 // pred_region
          %s1254 = smul.u32 2, %s38
          %s1256 = ssub.s32 512, 512
          %1257 = vsyncadd %s1209, %s1256
          %s1258 = smul.addr %s1254, 2
          %s1259 = smul.addr %s37, 4
          %s1260 = sadd.s32 %s1258, %s1259
          %s1261 = smul.addr %s1260, 128
          %s1262 = scalar_lea.hbm %s7, %s1261
          %s1263 = sshll.u32 %s1212, 4
          %s1264 = int_to_ptr.vmem [resolvable:$true] %s1263
          %1269 = dma.vmem_to_hbm [thread:$0]  %s1264, 512, %s1262, %s1209, 256, 256, 16
        $region76: #{tpu_custom_call.1} parent=39 // pred_fallthru
          _
      $region40: #{tpu_custom_call.1} parent=5 // pred_fallthru
        _
      %p1270 = scmp.le.s32.totalorder 2, %s27
      // Predicated region
      $region77: #{tpu_custom_call.1} parent=5 // pred_check
        %p1271 = pneg %p1270
      $region78: #{tpu_custom_call.1} parent=5 // pred_check_branch
        %1273 = sbr.rel (%p1271) target = $region80
      $region79: #{tpu_custom_call.1} parent=5 // pred_region
        %s1274 = ssub.s32 %s27, 2
        // Predicated region
        $region81: #{tpu_custom_call.1} parent=79 // pred_check
          %p1275 = pneg %p211
        $region82: #{tpu_custom_call.1} parent=79 // pred_check_branch
          %1277 = sbr.rel (%p1275) target = $region84
        $region83: #{tpu_custom_call.1} parent=79 // pred_region
          %s1278 = sand.u32 %s196, 1
          %s1279 = scalar_lea.sflag [#allocation6], %s1278
          %s1280 = sand.u32 %s196, 1
          %s1281 = smul.addr %s1280, 16
          %s1282 = scalar_lea.vmem [#allocation12], %s1281
          %1283 = dma.done %s1279, 256
        $region84: #{tpu_custom_call.1} parent=79 // pred_fallthru
          _
        // Predicated region
        $region85: #{tpu_custom_call.1} parent=79 // pred_check
          %p1284 = pneg %p239
        $region86: #{tpu_custom_call.1} parent=79 // pred_check_branch
          %1286 = sbr.rel (%p1284) target = $region88
        $region87: #{tpu_custom_call.1} parent=79 // pred_region
          %s1287 = sand.u32 %s33, 1
          %s1288 = scalar_lea.sflag [#allocation14], %s1287
          %s1289 = sand.u32 %s224, 1
          %s1290 = smul.addr %s1289, 32
          %s1291 = scalar_lea.vmem [#allocation13], %s1290
          %1292 = dma.done %s1288, 512
        $region88: #{tpu_custom_call.1} parent=79 // pred_fallthru
          _
        // Predicated region
        $region89: #{tpu_custom_call.1} parent=79 // pred_check
          %p1293 = pneg %p267
        $region90: #{tpu_custom_call.1} parent=79 // pred_check_branch
          %1295 = sbr.rel (%p1293) target = $region92
        $region91: #{tpu_custom_call.1} parent=79 // pred_region
          %s1296 = sand.u32 %s33, 1
          %s1297 = scalar_lea.sflag [#allocation14], %s1296
          %s1298 = sand.u32 %s252, 1
          %s1299 = smul.addr %s1298, 32
          %s1300 = scalar_lea.vmem [#allocation15], %s1299
          %1301 = dma.done %s1297, 512
        $region92: #{tpu_custom_call.1} parent=79 // pred_fallthru
          _
      $region80: #{tpu_custom_call.1} parent=5 // pred_fallthru
        _
    $region6: #{tpu_custom_call.1} parent=1 // loop_footer
      %s31 = sadd.s32 1, %s27
    $region7: #{tpu_custom_call.1} parent=1 // loop_footer_branch
      %26 = sbr.rel target = $region3
    $region8: #{tpu_custom_call.1} parent=1 // loop_exit
      _
    %1302 = vsyncpa [#allocation5], 1
    %s1303 = scalar_lea.sflag [#allocation5], 1
    %1304 = vsyncpa %s1303, 1
    %1305 = vsyncpa [#allocation8], 1
    %s1306 = scalar_lea.sflag [#allocation8], 1
    %1307 = vsyncpa %s1306, 1
    %1308 = vsyncpa [#allocation11], 1
    %1309 = vsyncpa [#allocation6], 1
    %s1310 = scalar_lea.sflag [#allocation6], 1
    %1311 = vsyncpa %s1310, 1
    %1312 = vsyncpa [#allocation14], 1
    %s1313 = scalar_lea.sflag [#allocation14], 1
    %1314 = vsyncpa %s1313, 1

</llo_original>
